<compile_context>
chip_gen: v7x
topology: tpu7x:2x2x1
jax: 0.10.0
libtpu: 0.0.40
codegen_flags: <defaults>
</compile_context>

<pallas_src>
import functools

import jax
import jax.numpy as jnp
from jax import lax
from jax.experimental import pallas as pl
from jax.experimental.pallas import tpu as pltpu

IGNORE_LABEL = -1


def _ppc_kernel(logits_ref, target_ref, sum_ref, cnt_ref, *, n, tile_n):
    # logits_ref: (TN, C) VMEM    target_ref: (TN, 1) int32 VMEM
    # sum_ref, cnt_ref: (1, 1) f32 SMEM — this tile's partial sum / valid count
    logits = logits_ref[...].astype(jnp.float32)            # (TN, C)
    tgt = target_ref[...]                                    # (TN, 1) int32
    tn, c = logits.shape

    # valid & in-bounds mask.  The last grid block is ragged (grid=cdiv(n,tile_n));
    # its out-of-bounds rows hold garbage and MUST be where-masked per row.
    row = pl.program_id(0) * tile_n + lax.broadcasted_iota(jnp.int32, (tn, 1), 0)
    mask = jnp.logical_and(tgt != IGNORE_LABEL, row < n)     # (TN, 1) bool

    ones_c = jnp.ones((c, 1), jnp.float32)

    # Numerically stable log-sum-exp over the class (lane) axis.
    m = jnp.max(logits, axis=-1, keepdims=True)              # (TN, 1)  XLU
    # TODO(synk): optional bf16 exp on v6e/v7x (~2x EUP throughput); kept f32 so
    # the result matches the f32 reference tightly on every generation.
    e = jnp.exp(logits - m)                                  # EUP
    exp_sum = jnp.dot(e, ones_c, preferred_element_type=jnp.float32)  # MXU (TN,1)
    lse = m + jnp.log(exp_sum)

    # Gather the target-class logit: lane-select then MXU row-sum.
    col = lax.broadcasted_iota(jnp.int32, logits.shape, 1)   # (TN, C)
    picked = jnp.dot(jnp.where(col == tgt, logits, 0.0), ones_c,
                     preferred_element_type=jnp.float32)     # (TN, 1)

    nll = jnp.where(mask, lse - picked, 0.0)                 # masked per-row NLL
    sum_ref[0, 0] = jnp.sum(nll)
    cnt_ref[0, 0] = jnp.sum(mask.astype(jnp.float32))


def _choose_tile_n(n, c, itemsize):
    """Row tile sized against a VMEM budget that is safe on v5e/v6e/v7x."""
    # Double-buffered logits stream budget ~12 MiB → total footprint stays well
    # under the 32 MiB scoped VMEM limit (v7x has only 64 MiB physical).
    budget = 12 * 1024 * 1024
    per_row = 2 * c * itemsize            # x2 for double buffering
    t = budget // max(per_row, 1)
    t = max(16, min(int(t), 8192))
    t = (t // 16) * 16                    # sublane multiple (covers bf16 too)
    if n <= t:
        return n                          # one grid step; full-dim block is legal
    return t


@functools.partial(jax.jit, static_argnames=("tile_n",))
def ppc_loss(contrast_logits, contrast_target, tile_n=None):
    """Cross-entropy with ignore_index=-1, mean over non-ignored rows."""
    n, c = contrast_logits.shape
    tgt = contrast_target.astype(jnp.int32).reshape(n, 1)

    if tile_n is None:
        tile_n = _choose_tile_n(n, c, contrast_logits.dtype.itemsize)
    num_tiles = pl.cdiv(n, tile_n)

    kernel = functools.partial(_ppc_kernel, n=n, tile_n=tile_n)

    part_sum, part_cnt = pl.pallas_call(
        kernel,
        out_shape=(
            jax.ShapeDtypeStruct((num_tiles, 1), jnp.float32),
            jax.ShapeDtypeStruct((num_tiles, 1), jnp.float32),
        ),
        grid_spec=pltpu.PrefetchScalarGridSpec(
            num_scalar_prefetch=0,
            grid=(num_tiles,),
            in_specs=[
                pl.BlockSpec((tile_n, c), lambda i: (i, 0)),
                pl.BlockSpec((tile_n, 1), lambda i: (i, 0)),
            ],
            out_specs=[
                pl.BlockSpec((1, 1), lambda i: (i, 0), memory_space=pltpu.SMEM),
                pl.BlockSpec((1, 1), lambda i: (i, 0), memory_space=pltpu.SMEM),
            ],
        ),
        compiler_params=pltpu.CompilerParams(
            dimension_semantics=("parallel",),      # independent tiles → megacore OK
            vmem_limit_bytes=32 * 1024 * 1024,
        ),
    )(contrast_logits, tgt)

    # PyTorch returns NaN if every row is ignored; 0/0 reproduces that.
    return jnp.sum(part_sum) / jnp.sum(part_cnt)


def _ppc_loss_ref(logits, target):
    """Pure-JAX reference matching F.cross_entropy(..., ignore_index=-1)."""
    logits = logits.astype(jnp.float32)
    tgt = target.astype(jnp.int32)
    lse = jax.nn.logsumexp(logits, axis=-1)
    picked = jnp.take_along_axis(
        logits, jnp.clip(tgt, 0, logits.shape[-1] - 1)[:, None], axis=-1)[:, 0]
    valid = (tgt != IGNORE_LABEL).astype(jnp.float32)
    return jnp.sum((lse - picked) * valid) / jnp.sum(valid)


if __name__ == "__main__":
    key = jax.random.PRNGKey(0)
    k1, k2 = jax.random.split(key)

    # contrast_logits: (num_pixels, num_classes * num_prototypes)
    N, C = 300, 32   # deliberately not a multiple of the row tile
    contrast_logits = jax.random.normal(k1, (N, C), dtype=jnp.float32)
    # targets in [0, C) with some rows set to ignore_label = -1
    contrast_target = jax.random.randint(k2, (N,), minval=-1, maxval=C)
    contrast_target = contrast_target.astype(jnp.float32)  # PPC casts .long()

    loss = jax.block_until_ready(ppc_loss(contrast_logits, contrast_target))
    ref = jax.block_until_ready(_ppc_loss_ref(contrast_logits, contrast_target))

    assert jnp.allclose(loss, ref, rtol=1e-5, atol=1e-5), (loss, ref)
    print("KERNEL_OK")
</pallas_src>

<mosaic_0001>
module attributes {stable_mosaic.version = 11 : i64} {
  func.func @_ppc_kernel(%arg0: i32, %arg1: memref<300x32xf32, #tpu.memory_space<vmem>>, %arg2: memref<300x1xi32, #tpu.memory_space<vmem>>, %arg3: memref<1x1xf32, #tpu.memory_space<smem>>, %arg4: memref<1x1xf32, #tpu.memory_space<smem>>) attributes {dimension_semantics = [#tpu.dimension_semantics<parallel>], iteration_bounds = array<i64: 1>, scalar_prefetch = 0 : i64, scratch_operands = 0 : i64, tpu.core_type = #tpu.core_type<tc>, window_params = [{transform_indices = @transform_0, window_bounds = array<i64: 300, 32>}, {transform_indices = @transform_1, window_bounds = array<i64: 300, 1>}, {transform_indices = @transform_2, window_bounds = array<i64: 1, 1>}, {transform_indices = @transform_3, window_bounds = array<i64: 1, 1>}]} {
    %c0 = arith.constant 0 : index
    %c0_0 = arith.constant 0 : index
    %0 = vector.load %arg1[%c0, %c0_0] : memref<300x32xf32, #tpu.memory_space<vmem>>, vector<300x32xf32>
    %c0_1 = arith.constant 0 : index
    %c0_2 = arith.constant 0 : index
    %1 = vector.load %arg2[%c0_1, %c0_2] : memref<300x1xi32, #tpu.memory_space<vmem>>, vector<300x1xi32>
    %c300_i32 = arith.constant 300 : i32
    %2 = arith.muli %arg0, %c300_i32 : i32
    %3 = tpu.iota {dimensions = array<i32: 0>} : vector<300x1xi32>
    %4 = vector.broadcast %2 : i32 to vector<300x1xi32>
    %5 = arith.addi %4, %3 : vector<300x1xi32>
    %c-1_i32 = arith.constant -1 : i32
    %6 = vector.broadcast %c-1_i32 : i32 to vector<300x1xi32>
    %7 = arith.cmpi ne, %1, %6 : vector<300x1xi32>
    %c300_i32_3 = arith.constant 300 : i32
    %8 = vector.broadcast %c300_i32_3 : i32 to vector<300x1xi32>
    %9 = arith.cmpi slt, %5, %8 : vector<300x1xi32>
    %10 = arith.andi %7, %9 : vector<300x1xi1>
    %cst = arith.constant 1.000000e+00 : f32
    %11 = vector.broadcast %cst : f32 to vector<32x1xf32>
    %cst_4 = arith.constant dense<0xFF800000> : vector<300xf32>
    %12 = vector.multi_reduction <maximumf>, %0, %cst_4 [1] : vector<300x32xf32> to vector<300xf32>
    %13 = vector.shape_cast %12 : vector<300xf32> to vector<300x1xf32>
    %14 = vector.broadcast %13 : vector<300x1xf32> to vector<300x32xf32>
    %15 = arith.subf %0, %14 : vector<300x32xf32>
    %16 = math.exp %15 : vector<300x32xf32>
    %cst_5 = arith.constant dense<0.000000e+00> : vector<300x1xf32>
    %17 = tpu.matmul %16, %11, %cst_5 {dimension_numbers = #tpu.dot_dimension_numbers<[1], [0], [0], [1], [0, 0, 1, 1], [], []>} : vector<300x32xf32>, vector<32x1xf32>, vector<300x1xf32> -> vector<300x1xf32>
    %18 = math.log %17 : vector<300x1xf32>
    %19 = arith.addf %13, %18 : vector<300x1xf32>
    %20 = tpu.iota {dimensions = array<i32: 1>} : vector<300x32xi32>
    %21 = vector.broadcast %1 : vector<300x1xi32> to vector<300x32xi32>
    %22 = arith.cmpi eq, %20, %21 : vector<300x32xi32>
    %cst_6 = arith.constant 0.000000e+00 : f32
    %23 = vector.broadcast %cst_6 : f32 to vector<300x32xf32>
    %24 = arith.select %22, %0, %23 : vector<300x32xi1>, vector<300x32xf32>
    %cst_7 = arith.constant dense<0.000000e+00> : vector<300x1xf32>
    %25 = tpu.matmul %24, %11, %cst_7 {dimension_numbers = #tpu.dot_dimension_numbers<[1], [0], [0], [1], [0, 0, 1, 1], [], []>} : vector<300x32xf32>, vector<32x1xf32>, vector<300x1xf32> -> vector<300x1xf32>
    %26 = arith.subf %19, %25 : vector<300x1xf32>
    %cst_8 = arith.constant 0.000000e+00 : f32
    %27 = vector.broadcast %cst_8 : f32 to vector<300x1xf32>
    %28 = arith.select %10, %26, %27 : vector<300x1xi1>, vector<300x1xf32>
    %29 = vector.shape_cast %28 : vector<300x1xf32> to vector<1x300x1xf32>
    %cst_9 = arith.constant dense<0.000000e+00> : vector<1xf32>
    %30 = vector.multi_reduction <add>, %29, %cst_9 [1, 2] : vector<1x300x1xf32> to vector<1xf32>
    %31 = vector.shape_cast %30 : vector<1xf32> to vector<1x1x1xf32>
    %32 = vector.extract %31[0, 0, 0] : f32 from vector<1x1x1xf32>
    %c0_10 = arith.constant 0 : index
    %c0_11 = arith.constant 0 : index
    %33 = memref.load %arg3[%c0_10, %c0_11] : memref<1x1xf32, #tpu.memory_space<smem>>
    memref.store %32, %arg3[%c0_10, %c0_11] : memref<1x1xf32, #tpu.memory_space<smem>>
    %34 = arith.extui %10 : vector<300x1xi1> to vector<300x1xi32>
    %35 = arith.sitofp %34 : vector<300x1xi32> to vector<300x1xf32>
    %36 = vector.shape_cast %35 : vector<300x1xf32> to vector<1x300x1xf32>
    %cst_12 = arith.constant dense<0.000000e+00> : vector<1xf32>
    %37 = vector.multi_reduction <add>, %36, %cst_12 [1, 2] : vector<1x300x1xf32> to vector<1xf32>
    %38 = vector.shape_cast %37 : vector<1xf32> to vector<1x1x1xf32>
    %39 = vector.extract %38[0, 0, 0] : f32 from vector<1x1x1xf32>
    %c0_13 = arith.constant 0 : index
    %c0_14 = arith.constant 0 : index
    %40 = memref.load %arg4[%c0_13, %c0_14] : memref<1x1xf32, #tpu.memory_space<smem>>
    memref.store %39, %arg4[%c0_13, %c0_14] : memref<1x1xf32, #tpu.memory_space<smem>>
    return
  }
  func.func @transform_0(%arg0: i32) -> (i32, i32) {
    %c0_i32 = arith.constant 0 : i32
    %c0_i32_0 = arith.constant 0 : i32
    return %arg0, %c0_i32 : i32, i32
  }
  func.func @transform_1(%arg0: i32) -> (i32, i32) {
    %c0_i32 = arith.constant 0 : i32
    %c0_i32_0 = arith.constant 0 : i32
    return %arg0, %c0_i32 : i32, i32
  }
  func.func @transform_2(%arg0: i32) -> (i32, i32) {
    %c0_i32 = arith.constant 0 : i32
    %c0_i32_0 = arith.constant 0 : i32
    return %arg0, %c0_i32 : i32, i32
  }
  func.func @transform_3(%arg0: i32) -> (i32, i32) {
    %c0_i32 = arith.constant 0 : i32
    %c0_i32_0 = arith.constant 0 : i32
    return %arg0, %c0_i32 : i32, i32
  }
}

</mosaic_0001>

<llo_original>
// kernel: ppc_loss.1
$region0: #{ppc_loss.1}
  #allocation0 [shape = 'u32[]', space=smem, size = 0x4, offset = 0x4, fixed_abs, tag = 'smem constant byte address 0x4 - core index']
  #allocation1 [shape = 'u32[144,128]{1,0:T(1,128)}', space=vmem, size = 0x12000, scoped, tag = 'internal scratch']
  %s0 = inlined_call_operand.vmem [shape: f32[300,32], index: 0, kind: input, shape index: {}]
  %s1 = inlined_call_operand.vmem [shape: s32[300,1], index: 1, kind: input, shape index: {}]
  %s2 = inlined_call_operand.hbm [shape: f32[1,1], index: 2, kind: output, shape index: {0}]
  %s3 = inlined_call_operand.hbm [shape: f32[1,1], index: 3, kind: output, shape index: {1}]
  %4 = xla_tuple %s2, %s3
  %s5 = sld [smem:[#allocation0]]
  $region26: #{ppc_loss.1} parent=0
    _
  %s7 = ssub.s32 1, %s5
  %s8 = scalar_select 0, %s7, %s5
  $region1: #{ppc_loss.1} parent=0
    #allocation2 [shape = 'u8[512]{0}', space=smem, size = 0x200, scoped, tag = 'output window, operand 0, single buffered']
    #allocation3 [shape = 's32[1]{0}', space=sflag, size = 0x4, scoped, tag = 'scoped memory for ppc_loss.1']
    #allocation4 [shape = 'u8[512]{0}', space=smem, size = 0x200, scoped, tag = 'output window, operand 1, single buffered']
    #allocation5 [shape = 's32[1]{0}', space=sflag, size = 0x4, scoped, tag = 'scoped memory for ppc_loss.1']
    %9 = vsyncpa [#allocation3], 0
    %10 = vsyncpa [#allocation5], 0
    // Predicated region
    $region2: #{ppc_loss.1} parent=1 // pred_check
      _
    $region3: #{ppc_loss.1} parent=1 // pred_check_branch
      %12 = sbr.rel (0) target = $region5
    $region4: #{ppc_loss.1} parent=1 // pred_region
      _
    $region5: #{ppc_loss.1} parent=1 // pred_fallthru
      _
    // Predicated region
    $region6: #{ppc_loss.1} parent=1 // pred_check
      _
    $region7: #{ppc_loss.1} parent=1 // pred_check_branch
      %14 = sbr.rel (0) target = $region9
    $region8: #{ppc_loss.1} parent=1 // pred_region
      _
    $region9: #{ppc_loss.1} parent=1 // pred_fallthru
      _
    %v15 = vld [vmem:[%s0] sm:$0xff]
    %v16 = vld [vmem:[%s0 + $0x8] sm:$0xff]
    %v17 = vld [vmem:[%s0 + $0x10] sm:$0xff]
    %v18 = vld [vmem:[%s0 + $0x18] sm:$0xff]
    %v19 = vld [vmem:[%s0 + $0x20] sm:$0xff]
    %v20 = vld [vmem:[%s0 + $0x28] sm:$0xff]
    %v21 = vld [vmem:[%s0 + $0x30] sm:$0xff]
    %v22 = vld [vmem:[%s0 + $0x38] sm:$0xff]
    %v23 = vld [vmem:[%s0 + $0x40] sm:$0xff]
    %v24 = vld [vmem:[%s0 + $0x48] sm:$0xff]
    %v25 = vld [vmem:[%s0 + $0x50] sm:$0xff]
    %v26 = vld [vmem:[%s0 + $0x58] sm:$0xff]
    %v27 = vld [vmem:[%s0 + $0x60] sm:$0xff]
    %v28 = vld [vmem:[%s0 + $0x68] sm:$0xff]
    %v29 = vld [vmem:[%s0 + $0x70] sm:$0xff]
    %v30 = vld [vmem:[%s0 + $0x78] sm:$0xff]
    %v31 = vld [vmem:[%s0 + $0x80] sm:$0xff]
    %v32 = vld [vmem:[%s0 + $0x88] sm:$0xff]
    %v33 = vld [vmem:[%s0 + $0x90] sm:$0xff]
    %v34 = vld [vmem:[%s0 + $0x98] sm:$0xff]
    %v35 = vld [vmem:[%s0 + $0xa0] sm:$0xff]
    %v36 = vld [vmem:[%s0 + $0xa8] sm:$0xff]
    %v37 = vld [vmem:[%s0 + $0xb0] sm:$0xff]
    %v38 = vld [vmem:[%s0 + $0xb8] sm:$0xff]
    %v39 = vld [vmem:[%s0 + $0xc0] sm:$0xff]
    %v40 = vld [vmem:[%s0 + $0xc8] sm:$0xff]
    %v41 = vld [vmem:[%s0 + $0xd0] sm:$0xff]
    %v42 = vld [vmem:[%s0 + $0xd8] sm:$0xff]
    %v43 = vld [vmem:[%s0 + $0xe0] sm:$0xff]
    %v44 = vld [vmem:[%s0 + $0xe8] sm:$0xff]
    %v45 = vld [vmem:[%s0 + $0xf0] sm:$0xff]
    %v46 = vld [vmem:[%s0 + $0xf8] sm:$0xff]
    %v47 = vld [vmem:[%s0 + $0x100] sm:$0xff]
    %v48 = vld [vmem:[%s0 + $0x108] sm:$0xff]
    %v49 = vld [vmem:[%s0 + $0x110] sm:$0xff]
    %v50 = vld [vmem:[%s0 + $0x118] sm:$0xff]
    %v51 = vld [vmem:[%s0 + $0x120] sm:$0xff]
    %v52 = vld [vmem:[%s0 + $0x128] sm:$0xf]
    %v53 = vld [vmem:[%s1] sm:$0xff]
    %v54 = vld [vmem:[%s1 + $0x8] sm:$0xff]
    %v55 = vld [vmem:[%s1 + $0x10] sm:$0xff]
    %v56 = vld [vmem:[%s1 + $0x18] sm:$0xff]
    %v57 = vld [vmem:[%s1 + $0x20] sm:$0xff]
    %v58 = vld [vmem:[%s1 + $0x28] sm:$0xff]
    %v59 = vld [vmem:[%s1 + $0x30] sm:$0xff]
    %v60 = vld [vmem:[%s1 + $0x38] sm:$0xff]
    %v61 = vld [vmem:[%s1 + $0x40] sm:$0xff]
    %v62 = vld [vmem:[%s1 + $0x48] sm:$0xff]
    %v63 = vld [vmem:[%s1 + $0x50] sm:$0xff]
    %v64 = vld [vmem:[%s1 + $0x58] sm:$0xff]
    %v65 = vld [vmem:[%s1 + $0x60] sm:$0xff]
    %v66 = vld [vmem:[%s1 + $0x68] sm:$0xff]
    %v67 = vld [vmem:[%s1 + $0x70] sm:$0xff]
    %v68 = vld [vmem:[%s1 + $0x78] sm:$0xff]
    %v69 = vld [vmem:[%s1 + $0x80] sm:$0xff]
    %v70 = vld [vmem:[%s1 + $0x88] sm:$0xff]
    %v71 = vld [vmem:[%s1 + $0x90] sm:$0xff]
    %v72 = vld [vmem:[%s1 + $0x98] sm:$0xff]
    %v73 = vld [vmem:[%s1 + $0xa0] sm:$0xff]
    %v74 = vld [vmem:[%s1 + $0xa8] sm:$0xff]
    %v75 = vld [vmem:[%s1 + $0xb0] sm:$0xff]
    %v76 = vld [vmem:[%s1 + $0xb8] sm:$0xff]
    %v77 = vld [vmem:[%s1 + $0xc0] sm:$0xff]
    %v78 = vld [vmem:[%s1 + $0xc8] sm:$0xff]
    %v79 = vld [vmem:[%s1 + $0xd0] sm:$0xff]
    %v80 = vld [vmem:[%s1 + $0xd8] sm:$0xff]
    %v81 = vld [vmem:[%s1 + $0xe0] sm:$0xff]
    %v82 = vld [vmem:[%s1 + $0xe8] sm:$0xff]
    %v83 = vld [vmem:[%s1 + $0xf0] sm:$0xff]
    %v84 = vld [vmem:[%s1 + $0xf8] sm:$0xff]
    %v85 = vld [vmem:[%s1 + $0x100] sm:$0xff]
    %v86 = vld [vmem:[%s1 + $0x108] sm:$0xff]
    %v87 = vld [vmem:[%s1 + $0x110] sm:$0xff]
    %v88 = vld [vmem:[%s1 + $0x118] sm:$0xff]
    %v89 = vld [vmem:[%s1 + $0x120] sm:$0xff]
    %v90 = vld [vmem:[%s1 + $0x128] sm:$0xf]
    %s91 = smul.u32 0, 300
    %v92 = vlaneseq
    %v93 = vshrl.u32 %v92, 7
    %v94 = vadd.s32 %v93, 8
    %v95 = vadd.s32 %v93, 16
    %v96 = vadd.s32 %v93, 24
    %v97 = vadd.s32 %v93, 32
    %v98 = vadd.s32 %v93, 40
    %v99 = vadd.s32 %v93, 48
    %v100 = vadd.s32 %v93, 56
    %v101 = vadd.s32 %v93, 64
    %v102 = vadd.s32 %v93, 72
    %v103 = vadd.s32 %v93, 80
    %v104 = vadd.s32 %v93, 88
    %v105 = vadd.s32 %v93, 96
    %v106 = vadd.s32 %v93, 104
    %v107 = vadd.s32 %v93, 112
    %v108 = vadd.s32 %v93, 120
    %v109 = vadd.s32 %v93, 128
    %v110 = vadd.s32 %v93, 136
    %v111 = vadd.s32 %v93, 144
    %v112 = vadd.s32 %v93, 152
    %v113 = vadd.s32 %v93, 160
    %v114 = vadd.s32 %v93, 168
    %v115 = vadd.s32 %v93, 176
    %v116 = vadd.s32 %v93, 184
    %v117 = vadd.s32 %v93, 192
    %v118 = vadd.s32 %v93, 200
    %v119 = vadd.s32 %v93, 208
    %v120 = vadd.s32 %v93, 216
    %v121 = vadd.s32 %v93, 224
    %v122 = vadd.s32 %v93, 232
    %v123 = vadd.s32 %v93, 240
    %v124 = vadd.s32 %v93, 248
    %v125 = vadd.s32 %v93, 256
    %v126 = vadd.s32 %v93, 264
    %v127 = vadd.s32 %v93, 272
    %v128 = vadd.s32 %v93, 280
    %v129 = vadd.s32 %v93, 288
    %v130 = vadd.s32 %v93, 296
    %v131 = vstv %s91
    %v132 = vadd.s32 %v131, %v93
    %v133 = vadd.s32 %v131, %v94
    %v134 = vadd.s32 %v131, %v95
    %v135 = vadd.s32 %v131, %v96
    %v136 = vadd.s32 %v131, %v97
    %v137 = vadd.s32 %v131, %v98
    %v138 = vadd.s32 %v131, %v99
    %v139 = vadd.s32 %v131, %v100
    %v140 = vadd.s32 %v131, %v101
    %v141 = vadd.s32 %v131, %v102
    %v142 = vadd.s32 %v131, %v103
    %v143 = vadd.s32 %v131, %v104
    %v144 = vadd.s32 %v131, %v105
    %v145 = vadd.s32 %v131, %v106
    %v146 = vadd.s32 %v131, %v107
    %v147 = vadd.s32 %v131, %v108
    %v148 = vadd.s32 %v131, %v109
    %v149 = vadd.s32 %v131, %v110
    %v150 = vadd.s32 %v131, %v111
    %v151 = vadd.s32 %v131, %v112
    %v152 = vadd.s32 %v131, %v113
    %v153 = vadd.s32 %v131, %v114
    %v154 = vadd.s32 %v131, %v115
    %v155 = vadd.s32 %v131, %v116
    %v156 = vadd.s32 %v131, %v117
    %v157 = vadd.s32 %v131, %v118
    %v158 = vadd.s32 %v131, %v119
    %v159 = vadd.s32 %v131, %v120
    %v160 = vadd.s32 %v131, %v121
    %v161 = vadd.s32 %v131, %v122
    %v162 = vadd.s32 %v131, %v123
    %v163 = vadd.s32 %v131, %v124
    %v164 = vadd.s32 %v131, %v125
    %v165 = vadd.s32 %v131, %v126
    %v166 = vadd.s32 %v131, %v127
    %v167 = vadd.s32 %v131, %v128
    %v168 = vadd.s32 %v131, %v129
    %v169 = vadd.s32 %v131, %v130
    %vm170 = vcmp.ne.s32.totalorder %v53, 4294967295
    %vm171 = vcmp.ne.s32.totalorder %v54, 4294967295
    %vm172 = vcmp.ne.s32.totalorder %v55, 4294967295
    %vm173 = vcmp.ne.s32.totalorder %v56, 4294967295
    %vm174 = vcmp.ne.s32.totalorder %v57, 4294967295
    %vm175 = vcmp.ne.s32.totalorder %v58, 4294967295
    %vm176 = vcmp.ne.s32.totalorder %v59, 4294967295
    %vm177 = vcmp.ne.s32.totalorder %v60, 4294967295
    %vm178 = vcmp.ne.s32.totalorder %v61, 4294967295
    %vm179 = vcmp.ne.s32.totalorder %v62, 4294967295
    %vm180 = vcmp.ne.s32.totalorder %v63, 4294967295
    %vm181 = vcmp.ne.s32.totalorder %v64, 4294967295
    %vm182 = vcmp.ne.s32.totalorder %v65, 4294967295
    %vm183 = vcmp.ne.s32.totalorder %v66, 4294967295
    %vm184 = vcmp.ne.s32.totalorder %v67, 4294967295
    %vm185 = vcmp.ne.s32.totalorder %v68, 4294967295
    %vm186 = vcmp.ne.s32.totalorder %v69, 4294967295
    %vm187 = vcmp.ne.s32.totalorder %v70, 4294967295
    %vm188 = vcmp.ne.s32.totalorder %v71, 4294967295
    %vm189 = vcmp.ne.s32.totalorder %v72, 4294967295
    %vm190 = vcmp.ne.s32.totalorder %v73, 4294967295
    %vm191 = vcmp.ne.s32.totalorder %v74, 4294967295
    %vm192 = vcmp.ne.s32.totalorder %v75, 4294967295
    %vm193 = vcmp.ne.s32.totalorder %v76, 4294967295
    %vm194 = vcmp.ne.s32.totalorder %v77, 4294967295
    %vm195 = vcmp.ne.s32.totalorder %v78, 4294967295
    %vm196 = vcmp.ne.s32.totalorder %v79, 4294967295
    %vm197 = vcmp.ne.s32.totalorder %v80, 4294967295
    %vm198 = vcmp.ne.s32.totalorder %v81, 4294967295
    %vm199 = vcmp.ne.s32.totalorder %v82, 4294967295
    %vm200 = vcmp.ne.s32.totalorder %v83, 4294967295
    %vm201 = vcmp.ne.s32.totalorder %v84, 4294967295
    %vm202 = vcmp.ne.s32.totalorder %v85, 4294967295
    %vm203 = vcmp.ne.s32.totalorder %v86, 4294967295
    %vm204 = vcmp.ne.s32.totalorder %v87, 4294967295
    %vm205 = vcmp.ne.s32.totalorder %v88, 4294967295
    %vm206 = vcmp.ne.s32.totalorder %v89, 4294967295
    %vm207 = vcmp.ne.s32.totalorder %v90, 4294967295
    %vm208 = vcmp.lt.s32.totalorder %v132, 300
    %vm209 = vcmp.lt.s32.totalorder %v133, 300
    %vm210 = vcmp.lt.s32.totalorder %v134, 300
    %vm211 = vcmp.lt.s32.totalorder %v135, 300
    %vm212 = vcmp.lt.s32.totalorder %v136, 300
    %vm213 = vcmp.lt.s32.totalorder %v137, 300
    %vm214 = vcmp.lt.s32.totalorder %v138, 300
    %vm215 = vcmp.lt.s32.totalorder %v139, 300
    %vm216 = vcmp.lt.s32.totalorder %v140, 300
    %vm217 = vcmp.lt.s32.totalorder %v141, 300
    %vm218 = vcmp.lt.s32.totalorder %v142, 300
    %vm219 = vcmp.lt.s32.totalorder %v143, 300
    %vm220 = vcmp.lt.s32.totalorder %v144, 300
    %vm221 = vcmp.lt.s32.totalorder %v145, 300
    %vm222 = vcmp.lt.s32.totalorder %v146, 300
    %vm223 = vcmp.lt.s32.totalorder %v147, 300
    %vm224 = vcmp.lt.s32.totalorder %v148, 300
    %vm225 = vcmp.lt.s32.totalorder %v149, 300
    %vm226 = vcmp.lt.s32.totalorder %v150, 300
    %vm227 = vcmp.lt.s32.totalorder %v151, 300
    %vm228 = vcmp.lt.s32.totalorder %v152, 300
    %vm229 = vcmp.lt.s32.totalorder %v153, 300
    %vm230 = vcmp.lt.s32.totalorder %v154, 300
    %vm231 = vcmp.lt.s32.totalorder %v155, 300
    %vm232 = vcmp.lt.s32.totalorder %v156, 300
    %vm233 = vcmp.lt.s32.totalorder %v157, 300
    %vm234 = vcmp.lt.s32.totalorder %v158, 300
    %vm235 = vcmp.lt.s32.totalorder %v159, 300
    %vm236 = vcmp.lt.s32.totalorder %v160, 300
    %vm237 = vcmp.lt.s32.totalorder %v161, 300
    %vm238 = vcmp.lt.s32.totalorder %v162, 300
    %vm239 = vcmp.lt.s32.totalorder %v163, 300
    %vm240 = vcmp.lt.s32.totalorder %v164, 300
    %vm241 = vcmp.lt.s32.totalorder %v165, 300
    %vm242 = vcmp.lt.s32.totalorder %v166, 300
    %vm243 = vcmp.lt.s32.totalorder %v167, 300
    %vm244 = vcmp.lt.s32.totalorder %v168, 300
    %vm245 = vcmp.lt.s32.totalorder %v169, 300
    %vm246 = vmand %vm170, %vm208
    %vm247 = vmand %vm171, %vm209
    %vm248 = vmand %vm172, %vm210
    %vm249 = vmand %vm173, %vm211
    %vm250 = vmand %vm174, %vm212
    %vm251 = vmand %vm175, %vm213
    %vm252 = vmand %vm176, %vm214
    %vm253 = vmand %vm177, %vm215
    %vm254 = vmand %vm178, %vm216
    %vm255 = vmand %vm179, %vm217
    %vm256 = vmand %vm180, %vm218
    %vm257 = vmand %vm181, %vm219
    %vm258 = vmand %vm182, %vm220
    %vm259 = vmand %vm183, %vm221
    %vm260 = vmand %vm184, %vm222
    %vm261 = vmand %vm185, %vm223
    %vm262 = vmand %vm186, %vm224
    %vm263 = vmand %vm187, %vm225
    %vm264 = vmand %vm188, %vm226
    %vm265 = vmand %vm189, %vm227
    %vm266 = vmand %vm190, %vm228
    %vm267 = vmand %vm191, %vm229
    %vm268 = vmand %vm192, %vm230
    %vm269 = vmand %vm193, %vm231
    %vm270 = vmand %vm194, %vm232
    %vm271 = vmand %vm195, %vm233
    %vm272 = vmand %vm196, %vm234
    %vm273 = vmand %vm197, %vm235
    %vm274 = vmand %vm198, %vm236
    %vm275 = vmand %vm199, %vm237
    %vm276 = vmand %vm200, %vm238
    %vm277 = vmand %vm201, %vm239
    %vm278 = vmand %vm202, %vm240
    %vm279 = vmand %vm203, %vm241
    %vm280 = vmand %vm204, %vm242
    %vm281 = vmand %vm205, %vm243
    %vm282 = vmand %vm206, %vm244
    %vm283 = vmand %vm207, %vm245
    %vm284 = vcmask 261120
    %v285 = vsel %vm284, %v15, -inf
    %286 = vmax.xlane.f32.xlu0 %v285
    %v287 = vpop.xlane.xlu0 %286
    %v288 = vsel %vm284, %v16, -inf
    %289 = vmax.xlane.f32.xlu0 %v288
    %v290 = vpop.xlane.xlu0 %289
    %v291 = vsel %vm284, %v17, -inf
    %292 = vmax.xlane.f32.xlu0 %v291
    %v293 = vpop.xlane.xlu0 %292
    %v294 = vsel %vm284, %v18, -inf
    %295 = vmax.xlane.f32.xlu0 %v294
    %v296 = vpop.xlane.xlu0 %295
    %v297 = vsel %vm284, %v19, -inf
    %298 = vmax.xlane.f32.xlu0 %v297
    %v299 = vpop.xlane.xlu0 %298
    %v300 = vsel %vm284, %v20, -inf
    %301 = vmax.xlane.f32.xlu0 %v300
    %v302 = vpop.xlane.xlu0 %301
    %v303 = vsel %vm284, %v21, -inf
    %304 = vmax.xlane.f32.xlu0 %v303
    %v305 = vpop.xlane.xlu0 %304
    %v306 = vsel %vm284, %v22, -inf
    %307 = vmax.xlane.f32.xlu0 %v306
    %v308 = vpop.xlane.xlu0 %307
    %v309 = vsel %vm284, %v23, -inf
    %310 = vmax.xlane.f32.xlu0 %v309
    %v311 = vpop.xlane.xlu0 %310
    %v312 = vsel %vm284, %v24, -inf
    %313 = vmax.xlane.f32.xlu0 %v312
    %v314 = vpop.xlane.xlu0 %313
    %v315 = vsel %vm284, %v25, -inf
    %316 = vmax.xlane.f32.xlu0 %v315
    %v317 = vpop.xlane.xlu0 %316
    %v318 = vsel %vm284, %v26, -inf
    %319 = vmax.xlane.f32.xlu0 %v318
    %v320 = vpop.xlane.xlu0 %319
    %v321 = vsel %vm284, %v27, -inf
    %322 = vmax.xlane.f32.xlu0 %v321
    %v323 = vpop.xlane.xlu0 %322
    %v324 = vsel %vm284, %v28, -inf
    %325 = vmax.xlane.f32.xlu0 %v324
    %v326 = vpop.xlane.xlu0 %325
    %v327 = vsel %vm284, %v29, -inf
    %328 = vmax.xlane.f32.xlu0 %v327
    %v329 = vpop.xlane.xlu0 %328
    %v330 = vsel %vm284, %v30, -inf
    %331 = vmax.xlane.f32.xlu0 %v330
    %v332 = vpop.xlane.xlu0 %331
    %v333 = vsel %vm284, %v31, -inf
    %334 = vmax.xlane.f32.xlu0 %v333
    %v335 = vpop.xlane.xlu0 %334
    %v336 = vsel %vm284, %v32, -inf
    %337 = vmax.xlane.f32.xlu0 %v336
    %v338 = vpop.xlane.xlu0 %337
    %v339 = vsel %vm284, %v33, -inf
    %340 = vmax.xlane.f32.xlu0 %v339
    %v341 = vpop.xlane.xlu0 %340
    %v342 = vsel %vm284, %v34, -inf
    %343 = vmax.xlane.f32.xlu0 %v342
    %v344 = vpop.xlane.xlu0 %343
    %v345 = vsel %vm284, %v35, -inf
    %346 = vmax.xlane.f32.xlu0 %v345
    %v347 = vpop.xlane.xlu0 %346
    %v348 = vsel %vm284, %v36, -inf
    %349 = vmax.xlane.f32.xlu0 %v348
    %v350 = vpop.xlane.xlu0 %349
    %v351 = vsel %vm284, %v37, -inf
    %352 = vmax.xlane.f32.xlu0 %v351
    %v353 = vpop.xlane.xlu0 %352
    %v354 = vsel %vm284, %v38, -inf
    %355 = vmax.xlane.f32.xlu0 %v354
    %v356 = vpop.xlane.xlu0 %355
    %v357 = vsel %vm284, %v39, -inf
    %358 = vmax.xlane.f32.xlu0 %v357
    %v359 = vpop.xlane.xlu0 %358
    %v360 = vsel %vm284, %v40, -inf
    %361 = vmax.xlane.f32.xlu0 %v360
    %v362 = vpop.xlane.xlu0 %361
    %v363 = vsel %vm284, %v41, -inf
    %364 = vmax.xlane.f32.xlu0 %v363
    %v365 = vpop.xlane.xlu0 %364
    %v366 = vsel %vm284, %v42, -inf
    %367 = vmax.xlane.f32.xlu0 %v366
    %v368 = vpop.xlane.xlu0 %367
    %v369 = vsel %vm284, %v43, -inf
    %370 = vmax.xlane.f32.xlu0 %v369
    %v371 = vpop.xlane.xlu0 %370
    %v372 = vsel %vm284, %v44, -inf
    %373 = vmax.xlane.f32.xlu0 %v372
    %v374 = vpop.xlane.xlu0 %373
    %v375 = vsel %vm284, %v45, -inf
    %376 = vmax.xlane.f32.xlu0 %v375
    %v377 = vpop.xlane.xlu0 %376
    %v378 = vsel %vm284, %v46, -inf
    %379 = vmax.xlane.f32.xlu0 %v378
    %v380 = vpop.xlane.xlu0 %379
    %v381 = vsel %vm284, %v47, -inf
    %382 = vmax.xlane.f32.xlu0 %v381
    %v383 = vpop.xlane.xlu0 %382
    %v384 = vsel %vm284, %v48, -inf
    %385 = vmax.xlane.f32.xlu0 %v384
    %v386 = vpop.xlane.xlu0 %385
    %v387 = vsel %vm284, %v49, -inf
    %388 = vmax.xlane.f32.xlu0 %v387
    %v389 = vpop.xlane.xlu0 %388
    %v390 = vsel %vm284, %v50, -inf
    %391 = vmax.xlane.f32.xlu0 %v390
    %v392 = vpop.xlane.xlu0 %391
    %v393 = vsel %vm284, %v51, -inf
    %394 = vmax.xlane.f32.xlu0 %v393
    %v395 = vpop.xlane.xlu0 %394
    %vm396 = vcmask 257024
    %v397 = vsel %vm396, %v52, -inf
    %398 = vmax.xlane.f32.xlu0 %v397
    %v399 = vpop.xlane.xlu0 %398
    %v400 = vsub.f32 %v15, %v287
    %v401 = vsub.f32 %v16, %v290
    %v402 = vsub.f32 %v17, %v293
    %v403 = vsub.f32 %v18, %v296
    %v404 = vsub.f32 %v19, %v299
    %v405 = vsub.f32 %v20, %v302
    %v406 = vsub.f32 %v21, %v305
    %v407 = vsub.f32 %v22, %v308
    %v408 = vsub.f32 %v23, %v311
    %v409 = vsub.f32 %v24, %v314
    %v410 = vsub.f32 %v25, %v317
    %v411 = vsub.f32 %v26, %v320
    %v412 = vsub.f32 %v27, %v323
    %v413 = vsub.f32 %v28, %v326
    %v414 = vsub.f32 %v29, %v329
    %v415 = vsub.f32 %v30, %v332
    %v416 = vsub.f32 %v31, %v335
    %v417 = vsub.f32 %v32, %v338
    %v418 = vsub.f32 %v33, %v341
    %v419 = vsub.f32 %v34, %v344
    %v420 = vsub.f32 %v35, %v347
    %v421 = vsub.f32 %v36, %v350
    %v422 = vsub.f32 %v37, %v353
    %v423 = vsub.f32 %v38, %v356
    %v424 = vsub.f32 %v39, %v359
    %v425 = vsub.f32 %v40, %v362
    %v426 = vsub.f32 %v41, %v365
    %v427 = vsub.f32 %v42, %v368
    %v428 = vsub.f32 %v43, %v371
    %v429 = vsub.f32 %v44, %v374
    %v430 = vsub.f32 %v45, %v377
    %v431 = vsub.f32 %v46, %v380
    %v432 = vsub.f32 %v47, %v383
    %v433 = vsub.f32 %v48, %v386
    %v434 = vsub.f32 %v49, %v389
    %v435 = vsub.f32 %v50, %v392
    %v436 = vsub.f32 %v51, %v395
    %v437 = vsub.f32 %v52, %v399
    %v438 = vmul.f32 %v400, 1.442695
    %v439 = vpow.pop %v438
    %v440 = vmul.f32 %v401, 1.442695
    %v441 = vpow.pop %v440
    %v442 = vmul.f32 %v402, 1.442695
    %v443 = vpow.pop %v442
    %v444 = vmul.f32 %v403, 1.442695
    %v445 = vpow.pop %v444
    %v446 = vmul.f32 %v404, 1.442695
    %v447 = vpow.pop %v446
    %v448 = vmul.f32 %v405, 1.442695
    %v449 = vpow.pop %v448
    %v450 = vmul.f32 %v406, 1.442695
    %v451 = vpow.pop %v450
    %v452 = vmul.f32 %v407, 1.442695
    %v453 = vpow.pop %v452
    %v454 = vmul.f32 %v408, 1.442695
    %v455 = vpow.pop %v454
    %v456 = vmul.f32 %v409, 1.442695
    %v457 = vpow.pop %v456
    %v458 = vmul.f32 %v410, 1.442695
    %v459 = vpow.pop %v458
    %v460 = vmul.f32 %v411, 1.442695
    %v461 = vpow.pop %v460
    %v462 = vmul.f32 %v412, 1.442695
    %v463 = vpow.pop %v462
    %v464 = vmul.f32 %v413, 1.442695
    %v465 = vpow.pop %v464
    %v466 = vmul.f32 %v414, 1.442695
    %v467 = vpow.pop %v466
    %v468 = vmul.f32 %v415, 1.442695
    %v469 = vpow.pop %v468
    %v470 = vmul.f32 %v416, 1.442695
    %v471 = vpow.pop %v470
    %v472 = vmul.f32 %v417, 1.442695
    %v473 = vpow.pop %v472
    %v474 = vmul.f32 %v418, 1.442695
    %v475 = vpow.pop %v474
    %v476 = vmul.f32 %v419, 1.442695
    %v477 = vpow.pop %v476
    %v478 = vmul.f32 %v420, 1.442695
    %v479 = vpow.pop %v478
    %v480 = vmul.f32 %v421, 1.442695
    %v481 = vpow.pop %v480
    %v482 = vmul.f32 %v422, 1.442695
    %v483 = vpow.pop %v482
    %v484 = vmul.f32 %v423, 1.442695
    %v485 = vpow.pop %v484
    %v486 = vmul.f32 %v424, 1.442695
    %v487 = vpow.pop %v486
    %v488 = vmul.f32 %v425, 1.442695
    %v489 = vpow.pop %v488
    %v490 = vmul.f32 %v426, 1.442695
    %v491 = vpow.pop %v490
    %v492 = vmul.f32 %v427, 1.442695
    %v493 = vpow.pop %v492
    %v494 = vmul.f32 %v428, 1.442695
    %v495 = vpow.pop %v494
    %v496 = vmul.f32 %v429, 1.442695
    %v497 = vpow.pop %v496
    %v498 = vmul.f32 %v430, 1.442695
    %v499 = vpow.pop %v498
    %v500 = vmul.f32 %v431, 1.442695
    %v501 = vpow.pop %v500
    %v502 = vmul.f32 %v432, 1.442695
    %v503 = vpow.pop %v502
    %v504 = vmul.f32 %v433, 1.442695
    %v505 = vpow.pop %v504
    %v506 = vmul.f32 %v434, 1.442695
    %v507 = vpow.pop %v506
    %v508 = vmul.f32 %v435, 1.442695
    %v509 = vpow.pop %v508
    %v510 = vmul.f32 %v436, 1.442695
    %v511 = vpow.pop %v510
    %v512 = vmul.f32 %v437, 1.442695
    %v513 = vpow.pop %v512
    %v515 = vsel %vm284, %v439, 0
    %v518 = vsel %vm284, %v441, 0
    %v521 = vsel %vm284, %v443, 0
    %v524 = vsel %vm284, %v445, 0
    %v527 = vsel %vm284, %v447, 0
    %v530 = vsel %vm284, %v449, 0
    %v533 = vsel %vm284, %v451, 0
    %v536 = vsel %vm284, %v453, 0
    %v539 = vsel %vm284, %v455, 0
    %v542 = vsel %vm284, %v457, 0
    %v545 = vsel %vm284, %v459, 0
    %v548 = vsel %vm284, %v461, 0
    %v551 = vsel %vm284, %v463, 0
    %v554 = vsel %vm284, %v465, 0
    %v557 = vsel %vm284, %v467, 0
    %v560 = vsel %vm284, %v469, 0
    %v563 = vsel %vm284, %v471, 0
    %v566 = vsel %vm284, %v473, 0
    %v569 = vsel %vm284, %v475, 0
    %v572 = vsel %vm284, %v477, 0
    %v575 = vsel %vm284, %v479, 0
    %v578 = vsel %vm284, %v481, 0
    %v581 = vsel %vm284, %v483, 0
    %v584 = vsel %vm284, %v485, 0
    %v587 = vsel %vm284, %v487, 0
    %v590 = vsel %vm284, %v489, 0
    %v593 = vsel %vm284, %v491, 0
    %v596 = vsel %vm284, %v493, 0
    %v599 = vsel %vm284, %v495, 0
    %v602 = vsel %vm284, %v497, 0
    %v605 = vsel %vm284, %v499, 0
    %v608 = vsel %vm284, %v501, 0
    %v611 = vsel %vm284, %v503, 0
    %v614 = vsel %vm284, %v505, 0
    %v617 = vsel %vm284, %v507, 0
    %v620 = vsel %vm284, %v509, 0
    %v623 = vsel %vm284, %v511, 0
    %v626 = vsel %vm284, %v513, 0
    %628 = vmatprep.subr.mxu0 0.0
    %629 = vmatpush1.msra.mxu0 1.0
    %630 = vmatprep.subr.mxu0 0.0
    %631 = vmatpush1.msra.mxu0 1.0
    %632 = vmatprep.subr.mxu0 0.0
    %633 = vmatpush1.msra.mxu0 1.0
    %634 = vmatprep.subr.mxu0 0.0
    %635 = vmatpush1.msra.mxu0 1.0
    %636 = vmatprep.subr.mxu0 0.0
    %637 = vmatpush1.msra.mxu0 0.0
    %638 = vmatprep.subr.mxu0 0.0
    %639 = vmatpush1.msra.mxu0 0.0
    %640 = vmatprep.subr.mxu0 0.0
    %641 = vmatpush1.msra.mxu0 0.0
    %642 = vmatprep.subr.mxu0 0.0
    %643 = vmatpush1.msra.mxu0 0.0
    %644 = vmatprep.subr.mxu0 0.0
    %645 = vmatpush1.msra.mxu0 0.0
    %646 = vmatprep.subr.mxu0 0.0
    %647 = vmatpush1.msra.mxu0 0.0
    %648 = vmatprep.subr.mxu0 0.0
    %649 = vmatpush1.msra.mxu0 0.0
    %650 = vmatprep.subr.mxu0 0.0
    %651 = vmatpush1.msra.mxu0 0.0
    %652 = vmatprep.subr.mxu0 0.0
    %653 = vmatpush1.msra.mxu0 0.0
    %654 = vmatprep.subr.mxu0 0.0
    %655 = vmatpush1.msra.mxu0 0.0
    %656 = vmatprep.subr.mxu0 0.0
    %657 = vmatpush1.msra.mxu0 0.0
    %658 = vmatprep.subr.mxu0 0.0
    %659 = vmatpush1.msra.mxu0 0.0
    %660 = vmatprep.subr.mxu0 0.0
    %661 = vmatpush1.msra.mxu0 0.0
    %662 = vmatprep.subr.mxu0 0.0
    %663 = vmatpush1.msra.mxu0 0.0
    %664 = vmatprep.subr.mxu0 0.0
    %665 = vmatpush1.msra.mxu0 0.0
    %666 = vmatprep.subr.mxu0 0.0
    %667 = vmatpush1.msra.mxu0 0.0
    %668 = vmatprep.subr.mxu0 0.0
    %669 = vmatpush1.msra.mxu0 0.0
    %670 = vmatprep.subr.mxu0 0.0
    %671 = vmatpush1.msra.mxu0 0.0
    %672 = vmatprep.subr.mxu0 0.0
    %673 = vmatpush1.msra.mxu0 0.0
    %674 = vmatprep.subr.mxu0 0.0
    %675 = vmatpush1.msra.mxu0 0.0
    %676 = vmatprep.subr.mxu0 0.0
    %677 = vmatpush1.msra.mxu0 0.0
    %678 = vmatprep.subr.mxu0 0.0
    %679 = vmatpush1.msra.mxu0 0.0
    %680 = vmatprep.subr.mxu0 0.0
    %681 = vmatpush1.msra.mxu0 0.0
    %682 = vmatprep.subr.mxu0 0.0
    %683 = vmatpush1.msra.mxu0 0.0
    %684 = vmatprep.subr.mxu0 0.0
    %685 = vmatpush1.msra.mxu0 0.0
    %686 = vmatprep.subr.mxu0 0.0
    %687 = vmatpush1.msra.mxu0 0.0
    %688 = vmatprep.subr.mxu0 0.0
    %689 = vmatpush1.msra.mxu0 0.0
    %690 = vmatprep.subr.mxu0 0.0
    %691 = vmatpush1.msra.mxu0 0.0
    %692 = vmatprep.mubr.f32.mxu0 0.0
    %693 = vmatmul.mubr.f32.gmra.mrb[0].mxu0 %v515
    %v694 = vpop.f32.mrb[0].mxu0
    %v695 = vadd.f32 0.0, %v694
    %v696 = vpop.f32.mrb[0].mxu0
    %697 = vmatprep.mubr.f32.mxu0 0.0
    %698 = vmatmul.mubr.f32.gmra.mrb[0].mxu0 %v518
    %v699 = vpop.f32.mrb[0].mxu0
    %v700 = vadd.f32 0.0, %v699
    %v701 = vpop.f32.mrb[0].mxu0
    %702 = vmatprep.mubr.f32.mxu0 0.0
    %703 = vmatmul.mubr.f32.gmra.mrb[0].mxu0 %v521
    %v704 = vpop.f32.mrb[0].mxu0
    %v705 = vadd.f32 0.0, %v704
    %v706 = vpop.f32.mrb[0].mxu0
    %707 = vmatprep.mubr.f32.mxu0 0.0
    %708 = vmatmul.mubr.f32.gmra.mrb[0].mxu0 %v524
    %v709 = vpop.f32.mrb[0].mxu0
    %v710 = vadd.f32 0.0, %v709
    %v711 = vpop.f32.mrb[0].mxu0
    %712 = vmatprep.mubr.f32.mxu0 0.0
    %713 = vmatmul.mubr.f32.gmra.mrb[0].mxu0 %v527
    %v714 = vpop.f32.mrb[0].mxu0
    %v715 = vadd.f32 0.0, %v714
    %v716 = vpop.f32.mrb[0].mxu0
    %717 = vmatprep.mubr.f32.mxu0 0.0
    %718 = vmatmul.mubr.f32.gmra.mrb[0].mxu0 %v530
    %v719 = vpop.f32.mrb[0].mxu0
    %v720 = vadd.f32 0.0, %v719
    %v721 = vpop.f32.mrb[0].mxu0
    %722 = vmatprep.mubr.f32.mxu0 0.0
    %723 = vmatmul.mubr.f32.gmra.mrb[0].mxu0 %v533
    %v724 = vpop.f32.mrb[0].mxu0
    %v725 = vadd.f32 0.0, %v724
    %v726 = vpop.f32.mrb[0].mxu0
    %727 = vmatprep.mubr.f32.mxu0 0.0
    %728 = vmatmul.mubr.f32.gmra.mrb[0].mxu0 %v536
    %v729 = vpop.f32.mrb[0].mxu0
    %v730 = vadd.f32 0.0, %v729
    %v731 = vpop.f32.mrb[0].mxu0
    %732 = vmatprep.mubr.f32.mxu0 0.0
    %733 = vmatmul.mubr.f32.gmra.mrb[0].mxu0 %v539
    %v734 = vpop.f32.mrb[0].mxu0
    %v735 = vadd.f32 0.0, %v734
    %v736 = vpop.f32.mrb[0].mxu0
    %737 = vmatprep.mubr.f32.mxu0 0.0
    %738 = vmatmul.mubr.f32.gmra.mrb[0].mxu0 %v542
    %v739 = vpop.f32.mrb[0].mxu0
    %v740 = vadd.f32 0.0, %v739
    %v741 = vpop.f32.mrb[0].mxu0
    %742 = vmatprep.mubr.f32.mxu0 0.0
    %743 = vmatmul.mubr.f32.gmra.mrb[0].mxu0 %v545
    %v744 = vpop.f32.mrb[0].mxu0
    %v745 = vadd.f32 0.0, %v744
    %v746 = vpop.f32.mrb[0].mxu0
    %747 = vmatprep.mubr.f32.mxu0 0.0
    %748 = vmatmul.mubr.f32.gmra.mrb[0].mxu0 %v548
    %v749 = vpop.f32.mrb[0].mxu0
    %v750 = vadd.f32 0.0, %v749
    %v751 = vpop.f32.mrb[0].mxu0
    %752 = vmatprep.mubr.f32.mxu0 0.0
    %753 = vmatmul.mubr.f32.gmra.mrb[0].mxu0 %v551
    %v754 = vpop.f32.mrb[0].mxu0
    %v755 = vadd.f32 0.0, %v754
    %v756 = vpop.f32.mrb[0].mxu0
    %757 = vmatprep.mubr.f32.mxu0 0.0
    %758 = vmatmul.mubr.f32.gmra.mrb[0].mxu0 %v554
    %v759 = vpop.f32.mrb[0].mxu0
    %v760 = vadd.f32 0.0, %v759
    %v761 = vpop.f32.mrb[0].mxu0
    %762 = vmatprep.mubr.f32.mxu0 0.0
    %763 = vmatmul.mubr.f32.gmra.mrb[0].mxu0 %v557
    %v764 = vpop.f32.mrb[0].mxu0
    %v765 = vadd.f32 0.0, %v764
    %v766 = vpop.f32.mrb[0].mxu0
    %767 = vmatprep.mubr.f32.mxu0 0.0
    %768 = vmatmul.mubr.f32.gmra.mrb[0].mxu0 %v560
    %v769 = vpop.f32.mrb[0].mxu0
    %v770 = vadd.f32 0.0, %v769
    %v771 = vpop.f32.mrb[0].mxu0
    %772 = vmatprep.mubr.f32.mxu0 0.0
    %773 = vmatmul.mubr.f32.gmra.mrb[0].mxu0 %v563
    %v774 = vpop.f32.mrb[0].mxu0
    %v775 = vadd.f32 0.0, %v774
    %v776 = vpop.f32.mrb[0].mxu0
    %777 = vmatprep.mubr.f32.mxu0 0.0
    %778 = vmatmul.mubr.f32.gmra.mrb[0].mxu0 %v566
    %v779 = vpop.f32.mrb[0].mxu0
    %v780 = vadd.f32 0.0, %v779
    %v781 = vpop.f32.mrb[0].mxu0
    %782 = vmatprep.mubr.f32.mxu0 0.0
    %783 = vmatmul.mubr.f32.gmra.mrb[0].mxu0 %v569
    %v784 = vpop.f32.mrb[0].mxu0
    %v785 = vadd.f32 0.0, %v784
    %v786 = vpop.f32.mrb[0].mxu0
    %787 = vmatprep.mubr.f32.mxu0 0.0
    %788 = vmatmul.mubr.f32.gmra.mrb[0].mxu0 %v572
    %v789 = vpop.f32.mrb[0].mxu0
    %v790 = vadd.f32 0.0, %v789
    %v791 = vpop.f32.mrb[0].mxu0
    %792 = vmatprep.mubr.f32.mxu0 0.0
    %793 = vmatmul.mubr.f32.gmra.mrb[0].mxu0 %v575
    %v794 = vpop.f32.mrb[0].mxu0
    %v795 = vadd.f32 0.0, %v794
    %v796 = vpop.f32.mrb[0].mxu0
    %797 = vmatprep.mubr.f32.mxu0 0.0
    %798 = vmatmul.mubr.f32.gmra.mrb[0].mxu0 %v578
    %v799 = vpop.f32.mrb[0].mxu0
    %v800 = vadd.f32 0.0, %v799
    %v801 = vpop.f32.mrb[0].mxu0
    %802 = vmatprep.mubr.f32.mxu0 0.0
    %803 = vmatmul.mubr.f32.gmra.mrb[0].mxu0 %v581
    %v804 = vpop.f32.mrb[0].mxu0
    %v805 = vadd.f32 0.0, %v804
    %v806 = vpop.f32.mrb[0].mxu0
    %807 = vmatprep.mubr.f32.mxu0 0.0
    %808 = vmatmul.mubr.f32.gmra.mrb[0].mxu0 %v584
    %v809 = vpop.f32.mrb[0].mxu0
    %v810 = vadd.f32 0.0, %v809
    %v811 = vpop.f32.mrb[0].mxu0
    %812 = vmatprep.mubr.f32.mxu0 0.0
    %813 = vmatmul.mubr.f32.gmra.mrb[0].mxu0 %v587
    %v814 = vpop.f32.mrb[0].mxu0
    %v815 = vadd.f32 0.0, %v814
    %v816 = vpop.f32.mrb[0].mxu0
    %817 = vmatprep.mubr.f32.mxu0 0.0
    %818 = vmatmul.mubr.f32.gmra.mrb[0].mxu0 %v590
    %v819 = vpop.f32.mrb[0].mxu0
    %v820 = vadd.f32 0.0, %v819
    %v821 = vpop.f32.mrb[0].mxu0
    %822 = vmatprep.mubr.f32.mxu0 0.0
    %823 = vmatmul.mubr.f32.gmra.mrb[0].mxu0 %v593
    %v824 = vpop.f32.mrb[0].mxu0
    %v825 = vadd.f32 0.0, %v824
    %v826 = vpop.f32.mrb[0].mxu0
    %827 = vmatprep.mubr.f32.mxu0 0.0
    %828 = vmatmul.mubr.f32.gmra.mrb[0].mxu0 %v596
    %v829 = vpop.f32.mrb[0].mxu0
    %v830 = vadd.f32 0.0, %v829
    %v831 = vpop.f32.mrb[0].mxu0
    %832 = vmatprep.mubr.f32.mxu0 0.0
    %833 = vmatmul.mubr.f32.gmra.mrb[0].mxu0 %v599
    %v834 = vpop.f32.mrb[0].mxu0
    %v835 = vadd.f32 0.0, %v834
    %v836 = vpop.f32.mrb[0].mxu0
    %837 = vmatprep.mubr.f32.mxu0 0.0
    %838 = vmatmul.mubr.f32.gmra.mrb[0].mxu0 %v602
    %v839 = vpop.f32.mrb[0].mxu0
    %v840 = vadd.f32 0.0, %v839
    %v841 = vpop.f32.mrb[0].mxu0
    %842 = vmatprep.mubr.f32.mxu0 0.0
    %843 = vmatmul.mubr.f32.gmra.mrb[0].mxu0 %v605
    %v844 = vpop.f32.mrb[0].mxu0
    %v845 = vadd.f32 0.0, %v844
    %v846 = vpop.f32.mrb[0].mxu0
    %847 = vmatprep.mubr.f32.mxu0 0.0
    %848 = vmatmul.mubr.f32.gmra.mrb[0].mxu0 %v608
    %v849 = vpop.f32.mrb[0].mxu0
    %v850 = vadd.f32 0.0, %v849
    %v851 = vpop.f32.mrb[0].mxu0
    %852 = vmatprep.mubr.f32.mxu0 0.0
    %853 = vmatmul.mubr.f32.gmra.mrb[0].mxu0 %v611
    %v854 = vpop.f32.mrb[0].mxu0
    %v855 = vadd.f32 0.0, %v854
    %v856 = vpop.f32.mrb[0].mxu0
    %857 = vmatprep.mubr.f32.mxu0 0.0
    %858 = vmatmul.mubr.f32.gmra.mrb[0].mxu0 %v614
    %v859 = vpop.f32.mrb[0].mxu0
    %v860 = vadd.f32 0.0, %v859
    %v861 = vpop.f32.mrb[0].mxu0
    %862 = vmatprep.mubr.f32.mxu0 0.0
    %863 = vmatmul.mubr.f32.gmra.mrb[0].mxu0 %v617
    %v864 = vpop.f32.mrb[0].mxu0
    %v865 = vadd.f32 0.0, %v864
    %v866 = vpop.f32.mrb[0].mxu0
    %867 = vmatprep.mubr.f32.mxu0 0.0
    %868 = vmatmul.mubr.f32.gmra.mrb[0].mxu0 %v620
    %v869 = vpop.f32.mrb[0].mxu0
    %v870 = vadd.f32 0.0, %v869
    %v871 = vpop.f32.mrb[0].mxu0
    %872 = vmatprep.mubr.f32.mxu0 0.0
    %873 = vmatmul.mubr.f32.gmra.mrb[0].mxu0 %v623
    %v874 = vpop.f32.mrb[0].mxu0
    %v875 = vadd.f32 0.0, %v874
    %v876 = vpop.f32.mrb[0].mxu0
    %877 = vmatprep.mubr.f32.mxu0 0.0
    %878 = vmatmul.mubr.f32.gmra.mrb[0].mxu0 %v626
    %v879 = vpop.f32.mrb[0].mxu0
    %v880 = vadd.f32 0.0, %v879
    %v881 = vpop.f32.mrb[0].mxu0
    %882 = vdwg.mxu0
    %v883 = vlog2.pop %v695
    %v884 = vmul.f32 %v883, 0.6931472
    %v885 = vlog2.pop %v700
    %v886 = vmul.f32 %v885, 0.6931472
    %v887 = vlog2.pop %v705
    %v888 = vmul.f32 %v887, 0.6931472
    %v889 = vlog2.pop %v710
    %v890 = vmul.f32 %v889, 0.6931472
    %v891 = vlog2.pop %v715
    %v892 = vmul.f32 %v891, 0.6931472
    %v893 = vlog2.pop %v720
    %v894 = vmul.f32 %v893, 0.6931472
    %v895 = vlog2.pop %v725
    %v896 = vmul.f32 %v895, 0.6931472
    %v897 = vlog2.pop %v730
    %v898 = vmul.f32 %v897, 0.6931472
    %v899 = vlog2.pop %v735
    %v900 = vmul.f32 %v899, 0.6931472
    %v901 = vlog2.pop %v740
    %v902 = vmul.f32 %v901, 0.6931472
    %v903 = vlog2.pop %v745
    %v904 = vmul.f32 %v903, 0.6931472
    %v905 = vlog2.pop %v750
    %v906 = vmul.f32 %v905, 0.6931472
    %v907 = vlog2.pop %v755
    %v908 = vmul.f32 %v907, 0.6931472
    %v909 = vlog2.pop %v760
    %v910 = vmul.f32 %v909, 0.6931472
    %v911 = vlog2.pop %v765
    %v912 = vmul.f32 %v911, 0.6931472
    %v913 = vlog2.pop %v770
    %v914 = vmul.f32 %v913, 0.6931472
    %v915 = vlog2.pop %v775
    %v916 = vmul.f32 %v915, 0.6931472
    %v917 = vlog2.pop %v780
    %v918 = vmul.f32 %v917, 0.6931472
    %v919 = vlog2.pop %v785
    %v920 = vmul.f32 %v919, 0.6931472
    %v921 = vlog2.pop %v790
    %v922 = vmul.f32 %v921, 0.6931472
    %v923 = vlog2.pop %v795
    %v924 = vmul.f32 %v923, 0.6931472
    %v925 = vlog2.pop %v800
    %v926 = vmul.f32 %v925, 0.6931472
    %v927 = vlog2.pop %v805
    %v928 = vmul.f32 %v927, 0.6931472
    %v929 = vlog2.pop %v810
    %v930 = vmul.f32 %v929, 0.6931472
    %v931 = vlog2.pop %v815
    %v932 = vmul.f32 %v931, 0.6931472
    %v933 = vlog2.pop %v820
    %v934 = vmul.f32 %v933, 0.6931472
    %v935 = vlog2.pop %v825
    %v936 = vmul.f32 %v935, 0.6931472
    %v937 = vlog2.pop %v830
    %v938 = vmul.f32 %v937, 0.6931472
    %v939 = vlog2.pop %v835
    %v940 = vmul.f32 %v939, 0.6931472
    %v941 = vlog2.pop %v840
    %v942 = vmul.f32 %v941, 0.6931472
    %v943 = vlog2.pop %v845
    %v944 = vmul.f32 %v943, 0.6931472
    %v945 = vlog2.pop %v850
    %v946 = vmul.f32 %v945, 0.6931472
    %v947 = vlog2.pop %v855
    %v948 = vmul.f32 %v947, 0.6931472
    %v949 = vlog2.pop %v860
    %v950 = vmul.f32 %v949, 0.6931472
    %v951 = vlog2.pop %v865
    %v952 = vmul.f32 %v951, 0.6931472
    %v953 = vlog2.pop %v870
    %v954 = vmul.f32 %v953, 0.6931472
    %v955 = vlog2.pop %v875
    %v956 = vmul.f32 %v955, 0.6931472
    %v957 = vlog2.pop %v880
    %v958 = vmul.f32 %v957, 0.6931472
    %v959 = vadd.f32 %v287, %v884
    %v960 = vadd.f32 %v290, %v886
    %v961 = vadd.f32 %v293, %v888
    %v962 = vadd.f32 %v296, %v890
    %v963 = vadd.f32 %v299, %v892
    %v964 = vadd.f32 %v302, %v894
    %v965 = vadd.f32 %v305, %v896
    %v966 = vadd.f32 %v308, %v898
    %v967 = vadd.f32 %v311, %v900
    %v968 = vadd.f32 %v314, %v902
    %v969 = vadd.f32 %v317, %v904
    %v970 = vadd.f32 %v320, %v906
    %v971 = vadd.f32 %v323, %v908
    %v972 = vadd.f32 %v326, %v910
    %v973 = vadd.f32 %v329, %v912
    %v974 = vadd.f32 %v332, %v914
    %v975 = vadd.f32 %v335, %v916
    %v976 = vadd.f32 %v338, %v918
    %v977 = vadd.f32 %v341, %v920
    %v978 = vadd.f32 %v344, %v922
    %v979 = vadd.f32 %v347, %v924
    %v980 = vadd.f32 %v350, %v926
    %v981 = vadd.f32 %v353, %v928
    %v982 = vadd.f32 %v356, %v930
    %v983 = vadd.f32 %v359, %v932
    %v984 = vadd.f32 %v362, %v934
    %v985 = vadd.f32 %v365, %v936
    %v986 = vadd.f32 %v368, %v938
    %v987 = vadd.f32 %v371, %v940
    %v988 = vadd.f32 %v374, %v942
    %v989 = vadd.f32 %v377, %v944
    %v990 = vadd.f32 %v380, %v946
    %v991 = vadd.f32 %v383, %v948
    %v992 = vadd.f32 %v386, %v950
    %v993 = vadd.f32 %v389, %v952
    %v994 = vadd.f32 %v392, %v954
    %v995 = vadd.f32 %v395, %v956
    %v996 = vadd.f32 %v399, %v958
    %v997 = vlaneseq
    %v998 = vand.u32 %v997, 127
    %999 = vset.pattern.permute.xlu0 0
    %1000 = vperm.xlu0 %999, %v53
    %v1001 = vpop.permute.xlu0 %1000
    %1002 = vset.pattern.permute.xlu0 0
    %1003 = vperm.xlu0 %1002, %v54
    %v1004 = vpop.permute.xlu0 %1003
    %1005 = vset.pattern.permute.xlu0 0
    %1006 = vperm.xlu0 %1005, %v55
    %v1007 = vpop.permute.xlu0 %1006
    %1008 = vset.pattern.permute.xlu0 0
    %1009 = vperm.xlu0 %1008, %v56
    %v1010 = vpop.permute.xlu0 %1009
    %1011 = vset.pattern.permute.xlu0 0
    %1012 = vperm.xlu0 %1011, %v57
    %v1013 = vpop.permute.xlu0 %1012
    %1014 = vset.pattern.permute.xlu0 0
    %1015 = vperm.xlu0 %1014, %v58
    %v1016 = vpop.permute.xlu0 %1015
    %1017 = vset.pattern.permute.xlu0 0
    %1018 = vperm.xlu0 %1017, %v59
    %v1019 = vpop.permute.xlu0 %1018
    %1020 = vset.pattern.permute.xlu0 0
    %1021 = vperm.xlu0 %1020, %v60
    %v1022 = vpop.permute.xlu0 %1021
    %1023 = vset.pattern.permute.xlu0 0
    %1024 = vperm.xlu0 %1023, %v61
    %v1025 = vpop.permute.xlu0 %1024
    %1026 = vset.pattern.permute.xlu0 0
    %1027 = vperm.xlu0 %1026, %v62
    %v1028 = vpop.permute.xlu0 %1027
    %1029 = vset.pattern.permute.xlu0 0
    %1030 = vperm.xlu0 %1029, %v63
    %v1031 = vpop.permute.xlu0 %1030
    %1032 = vset.pattern.permute.xlu0 0
    %1033 = vperm.xlu0 %1032, %v64
    %v1034 = vpop.permute.xlu0 %1033
    %1035 = vset.pattern.permute.xlu0 0
    %1036 = vperm.xlu0 %1035, %v65
    %v1037 = vpop.permute.xlu0 %1036
    %1038 = vset.pattern.permute.xlu0 0
    %1039 = vperm.xlu0 %1038, %v66
    %v1040 = vpop.permute.xlu0 %1039
    %1041 = vset.pattern.permute.xlu0 0
    %1042 = vperm.xlu0 %1041, %v67
    %v1043 = vpop.permute.xlu0 %1042
    %1044 = vset.pattern.permute.xlu0 0
    %1045 = vperm.xlu0 %1044, %v68
    %v1046 = vpop.permute.xlu0 %1045
    %1047 = vset.pattern.permute.xlu0 0
    %1048 = vperm.xlu0 %1047, %v69
    %v1049 = vpop.permute.xlu0 %1048
    %1050 = vset.pattern.permute.xlu0 0
    %1051 = vperm.xlu0 %1050, %v70
    %v1052 = vpop.permute.xlu0 %1051
    %1053 = vset.pattern.permute.xlu0 0
    %1054 = vperm.xlu0 %1053, %v71
    %v1055 = vpop.permute.xlu0 %1054
    %1056 = vset.pattern.permute.xlu0 0
    %1057 = vperm.xlu0 %1056, %v72
    %v1058 = vpop.permute.xlu0 %1057
    %1059 = vset.pattern.permute.xlu0 0
    %1060 = vperm.xlu0 %1059, %v73
    %v1061 = vpop.permute.xlu0 %1060
    %1062 = vset.pattern.permute.xlu0 0
    %1063 = vperm.xlu0 %1062, %v74
    %v1064 = vpop.permute.xlu0 %1063
    %1065 = vset.pattern.permute.xlu0 0
    %1066 = vperm.xlu0 %1065, %v75
    %v1067 = vpop.permute.xlu0 %1066
    %1068 = vset.pattern.permute.xlu0 0
    %1069 = vperm.xlu0 %1068, %v76
    %v1070 = vpop.permute.xlu0 %1069
    %1071 = vset.pattern.permute.xlu0 0
    %1072 = vperm.xlu0 %1071, %v77
    %v1073 = vpop.permute.xlu0 %1072
    %1074 = vset.pattern.permute.xlu0 0
    %1075 = vperm.xlu0 %1074, %v78
    %v1076 = vpop.permute.xlu0 %1075
    %1077 = vset.pattern.permute.xlu0 0
    %1078 = vperm.xlu0 %1077, %v79
    %v1079 = vpop.permute.xlu0 %1078
    %1080 = vset.pattern.permute.xlu0 0
    %1081 = vperm.xlu0 %1080, %v80
    %v1082 = vpop.permute.xlu0 %1081
    %1083 = vset.pattern.permute.xlu0 0
    %1084 = vperm.xlu0 %1083, %v81
    %v1085 = vpop.permute.xlu0 %1084
    %1086 = vset.pattern.permute.xlu0 0
    %1087 = vperm.xlu0 %1086, %v82
    %v1088 = vpop.permute.xlu0 %1087
    %1089 = vset.pattern.permute.xlu0 0
    %1090 = vperm.xlu0 %1089, %v83
    %v1091 = vpop.permute.xlu0 %1090
    %1092 = vset.pattern.permute.xlu0 0
    %1093 = vperm.xlu0 %1092, %v84
    %v1094 = vpop.permute.xlu0 %1093
    %1095 = vset.pattern.permute.xlu0 0
    %1096 = vperm.xlu0 %1095, %v85
    %v1097 = vpop.permute.xlu0 %1096
    %1098 = vset.pattern.permute.xlu0 0
    %1099 = vperm.xlu0 %1098, %v86
    %v1100 = vpop.permute.xlu0 %1099
    %1101 = vset.pattern.permute.xlu0 0
    %1102 = vperm.xlu0 %1101, %v87
    %v1103 = vpop.permute.xlu0 %1102
    %1104 = vset.pattern.permute.xlu0 0
    %1105 = vperm.xlu0 %1104, %v88
    %v1106 = vpop.permute.xlu0 %1105
    %1107 = vset.pattern.permute.xlu0 0
    %1108 = vperm.xlu0 %1107, %v89
    %v1109 = vpop.permute.xlu0 %1108
    %1110 = vset.pattern.permute.xlu0 0
    %1111 = vperm.xlu0 %1110, %v90
    %v1112 = vpop.permute.xlu0 %1111
    %vm1113 = vcmp.eq.s32.totalorder %v998, %v1001
    %vm1114 = vcmp.eq.s32.totalorder %v998, %v1004
    %vm1115 = vcmp.eq.s32.totalorder %v998, %v1007
    %vm1116 = vcmp.eq.s32.totalorder %v998, %v1010
    %vm1117 = vcmp.eq.s32.totalorder %v998, %v1013
    %vm1118 = vcmp.eq.s32.totalorder %v998, %v1016
    %vm1119 = vcmp.eq.s32.totalorder %v998, %v1019
    %vm1120 = vcmp.eq.s32.totalorder %v998, %v1022
    %vm1121 = vcmp.eq.s32.totalorder %v998, %v1025
    %vm1122 = vcmp.eq.s32.totalorder %v998, %v1028
    %vm1123 = vcmp.eq.s32.totalorder %v998, %v1031
    %vm1124 = vcmp.eq.s32.totalorder %v998, %v1034
    %vm1125 = vcmp.eq.s32.totalorder %v998, %v1037
    %vm1126 = vcmp.eq.s32.totalorder %v998, %v1040
    %vm1127 = vcmp.eq.s32.totalorder %v998, %v1043
    %vm1128 = vcmp.eq.s32.totalorder %v998, %v1046
    %vm1129 = vcmp.eq.s32.totalorder %v998, %v1049
    %vm1130 = vcmp.eq.s32.totalorder %v998, %v1052
    %vm1131 = vcmp.eq.s32.totalorder %v998, %v1055
    %vm1132 = vcmp.eq.s32.totalorder %v998, %v1058
    %vm1133 = vcmp.eq.s32.totalorder %v998, %v1061
    %vm1134 = vcmp.eq.s32.totalorder %v998, %v1064
    %vm1135 = vcmp.eq.s32.totalorder %v998, %v1067
    %vm1136 = vcmp.eq.s32.totalorder %v998, %v1070
    %vm1137 = vcmp.eq.s32.totalorder %v998, %v1073
    %vm1138 = vcmp.eq.s32.totalorder %v998, %v1076
    %vm1139 = vcmp.eq.s32.totalorder %v998, %v1079
    %vm1140 = vcmp.eq.s32.totalorder %v998, %v1082
    %vm1141 = vcmp.eq.s32.totalorder %v998, %v1085
    %vm1142 = vcmp.eq.s32.totalorder %v998, %v1088
    %vm1143 = vcmp.eq.s32.totalorder %v998, %v1091
    %vm1144 = vcmp.eq.s32.totalorder %v998, %v1094
    %vm1145 = vcmp.eq.s32.totalorder %v998, %v1097
    %vm1146 = vcmp.eq.s32.totalorder %v998, %v1100
    %vm1147 = vcmp.eq.s32.totalorder %v998, %v1103
    %vm1148 = vcmp.eq.s32.totalorder %v998, %v1106
    %vm1149 = vcmp.eq.s32.totalorder %v998, %v1109
    %vm1150 = vcmp.eq.s32.totalorder %v998, %v1112
    %v1151 = vsel %vm1113, %v15, 0.0
    %v1152 = vsel %vm1114, %v16, 0.0
    %v1153 = vsel %vm1115, %v17, 0.0
    %v1154 = vsel %vm1116, %v18, 0.0
    %v1155 = vsel %vm1117, %v19, 0.0
    %v1156 = vsel %vm1118, %v20, 0.0
    %v1157 = vsel %vm1119, %v21, 0.0
    %v1158 = vsel %vm1120, %v22, 0.0
    %v1159 = vsel %vm1121, %v23, 0.0
    %v1160 = vsel %vm1122, %v24, 0.0
    %v1161 = vsel %vm1123, %v25, 0.0
    %v1162 = vsel %vm1124, %v26, 0.0
    %v1163 = vsel %vm1125, %v27, 0.0
    %v1164 = vsel %vm1126, %v28, 0.0
    %v1165 = vsel %vm1127, %v29, 0.0
    %v1166 = vsel %vm1128, %v30, 0.0
    %v1167 = vsel %vm1129, %v31, 0.0
    %v1168 = vsel %vm1130, %v32, 0.0
    %v1169 = vsel %vm1131, %v33, 0.0
    %v1170 = vsel %vm1132, %v34, 0.0
    %v1171 = vsel %vm1133, %v35, 0.0
    %v1172 = vsel %vm1134, %v36, 0.0
    %v1173 = vsel %vm1135, %v37, 0.0
    %v1174 = vsel %vm1136, %v38, 0.0
    %v1175 = vsel %vm1137, %v39, 0.0
    %v1176 = vsel %vm1138, %v40, 0.0
    %v1177 = vsel %vm1139, %v41, 0.0
    %v1178 = vsel %vm1140, %v42, 0.0
    %v1179 = vsel %vm1141, %v43, 0.0
    %v1180 = vsel %vm1142, %v44, 0.0
    %v1181 = vsel %vm1143, %v45, 0.0
    %v1182 = vsel %vm1144, %v46, 0.0
    %v1183 = vsel %vm1145, %v47, 0.0
    %v1184 = vsel %vm1146, %v48, 0.0
    %v1185 = vsel %vm1147, %v49, 0.0
    %v1186 = vsel %vm1148, %v50, 0.0
    %v1187 = vsel %vm1149, %v51, 0.0
    %v1188 = vsel %vm1150, %v52, 0.0
    %v1190 = vsel %vm284, %v1151, 0
    %v1193 = vsel %vm284, %v1152, 0
    %v1196 = vsel %vm284, %v1153, 0
    %v1199 = vsel %vm284, %v1154, 0
    %v1202 = vsel %vm284, %v1155, 0
    %v1205 = vsel %vm284, %v1156, 0
    %v1208 = vsel %vm284, %v1157, 0
    %v1211 = vsel %vm284, %v1158, 0
    %v1214 = vsel %vm284, %v1159, 0
    %v1217 = vsel %vm284, %v1160, 0
    %v1220 = vsel %vm284, %v1161, 0
    %v1223 = vsel %vm284, %v1162, 0
    %v1226 = vsel %vm284, %v1163, 0
    %v1229 = vsel %vm284, %v1164, 0
    %v1232 = vsel %vm284, %v1165, 0
    %v1235 = vsel %vm284, %v1166, 0
    %v1238 = vsel %vm284, %v1167, 0
    %v1241 = vsel %vm284, %v1168, 0
    %v1244 = vsel %vm284, %v1169, 0
    %v1247 = vsel %vm284, %v1170, 0
    %v1250 = vsel %vm284, %v1171, 0
    %v1253 = vsel %vm284, %v1172, 0
    %v1256 = vsel %vm284, %v1173, 0
    %v1259 = vsel %vm284, %v1174, 0
    %v1262 = vsel %vm284, %v1175, 0
    %v1265 = vsel %vm284, %v1176, 0
    %v1268 = vsel %vm284, %v1177, 0
    %v1271 = vsel %vm284, %v1178, 0
    %v1274 = vsel %vm284, %v1179, 0
    %v1277 = vsel %vm284, %v1180, 0
    %v1280 = vsel %vm284, %v1181, 0
    %v1283 = vsel %vm284, %v1182, 0
    %v1286 = vsel %vm284, %v1183, 0
    %v1289 = vsel %vm284, %v1184, 0
    %v1292 = vsel %vm284, %v1185, 0
    %v1295 = vsel %vm284, %v1186, 0
    %v1298 = vsel %vm284, %v1187, 0
    %v1301 = vsel %vm284, %v1188, 0
    %1303 = vmatprep.subr.mxu0 0.0
    %1304 = vmatpush1.msra.mxu0 1.0
    %1305 = vmatprep.subr.mxu0 0.0
    %1306 = vmatpush1.msra.mxu0 1.0
    %1307 = vmatprep.subr.mxu0 0.0
    %1308 = vmatpush1.msra.mxu0 1.0
    %1309 = vmatprep.subr.mxu0 0.0
    %1310 = vmatpush1.msra.mxu0 1.0
    %1311 = vmatprep.subr.mxu0 0.0
    %1312 = vmatpush1.msra.mxu0 0.0
    %1313 = vmatprep.subr.mxu0 0.0
    %1314 = vmatpush1.msra.mxu0 0.0
    %1315 = vmatprep.subr.mxu0 0.0
    %1316 = vmatpush1.msra.mxu0 0.0
    %1317 = vmatprep.subr.mxu0 0.0
    %1318 = vmatpush1.msra.mxu0 0.0
    %1319 = vmatprep.subr.mxu0 0.0
    %1320 = vmatpush1.msra.mxu0 0.0
    %1321 = vmatprep.subr.mxu0 0.0
    %1322 = vmatpush1.msra.mxu0 0.0
    %1323 = vmatprep.subr.mxu0 0.0
    %1324 = vmatpush1.msra.mxu0 0.0
    %1325 = vmatprep.subr.mxu0 0.0
    %1326 = vmatpush1.msra.mxu0 0.0
    %1327 = vmatprep.subr.mxu0 0.0
    %1328 = vmatpush1.msra.mxu0 0.0
    %1329 = vmatprep.subr.mxu0 0.0
    %1330 = vmatpush1.msra.mxu0 0.0
    %1331 = vmatprep.subr.mxu0 0.0
    %1332 = vmatpush1.msra.mxu0 0.0
    %1333 = vmatprep.subr.mxu0 0.0
    %1334 = vmatpush1.msra.mxu0 0.0
    %1335 = vmatprep.subr.mxu0 0.0
    %1336 = vmatpush1.msra.mxu0 0.0
    %1337 = vmatprep.subr.mxu0 0.0
    %1338 = vmatpush1.msra.mxu0 0.0
    %1339 = vmatprep.subr.mxu0 0.0
    %1340 = vmatpush1.msra.mxu0 0.0
    %1341 = vmatprep.subr.mxu0 0.0
    %1342 = vmatpush1.msra.mxu0 0.0
    %1343 = vmatprep.subr.mxu0 0.0
    %1344 = vmatpush1.msra.mxu0 0.0
    %1345 = vmatprep.subr.mxu0 0.0
    %1346 = vmatpush1.msra.mxu0 0.0
    %1347 = vmatprep.subr.mxu0 0.0
    %1348 = vmatpush1.msra.mxu0 0.0
    %1349 = vmatprep.subr.mxu0 0.0
    %1350 = vmatpush1.msra.mxu0 0.0
    %1351 = vmatprep.subr.mxu0 0.0
    %1352 = vmatpush1.msra.mxu0 0.0
    %1353 = vmatprep.subr.mxu0 0.0
    %1354 = vmatpush1.msra.mxu0 0.0
    %1355 = vmatprep.subr.mxu0 0.0
    %1356 = vmatpush1.msra.mxu0 0.0
    %1357 = vmatprep.subr.mxu0 0.0
    %1358 = vmatpush1.msra.mxu0 0.0
    %1359 = vmatprep.subr.mxu0 0.0
    %1360 = vmatpush1.msra.mxu0 0.0
    %1361 = vmatprep.subr.mxu0 0.0
    %1362 = vmatpush1.msra.mxu0 0.0
    %1363 = vmatprep.subr.mxu0 0.0
    %1364 = vmatpush1.msra.mxu0 0.0
    %1365 = vmatprep.subr.mxu0 0.0
    %1366 = vmatpush1.msra.mxu0 0.0
    %1367 = vmatprep.mubr.f32.mxu0 0.0
    %1368 = vmatmul.mubr.f32.gmra.mrb[0].mxu0 %v1190
    %v1369 = vpop.f32.mrb[0].mxu0
    %v1370 = vadd.f32 0.0, %v1369
    %v1371 = vpop.f32.mrb[0].mxu0
    %1372 = vmatprep.mubr.f32.mxu0 0.0
    %1373 = vmatmul.mubr.f32.gmra.mrb[0].mxu0 %v1193
    %v1374 = vpop.f32.mrb[0].mxu0
    %v1375 = vadd.f32 0.0, %v1374
    %v1376 = vpop.f32.mrb[0].mxu0
    %1377 = vmatprep.mubr.f32.mxu0 0.0
    %1378 = vmatmul.mubr.f32.gmra.mrb[0].mxu0 %v1196
    %v1379 = vpop.f32.mrb[0].mxu0
    %v1380 = vadd.f32 0.0, %v1379
    %v1381 = vpop.f32.mrb[0].mxu0
    %1382 = vmatprep.mubr.f32.mxu0 0.0
    %1383 = vmatmul.mubr.f32.gmra.mrb[0].mxu0 %v1199
    %v1384 = vpop.f32.mrb[0].mxu0
    %v1385 = vadd.f32 0.0, %v1384
    %v1386 = vpop.f32.mrb[0].mxu0
    %1387 = vmatprep.mubr.f32.mxu0 0.0
    %1388 = vmatmul.mubr.f32.gmra.mrb[0].mxu0 %v1202
    %v1389 = vpop.f32.mrb[0].mxu0
    %v1390 = vadd.f32 0.0, %v1389
    %v1391 = vpop.f32.mrb[0].mxu0
    %1392 = vmatprep.mubr.f32.mxu0 0.0
    %1393 = vmatmul.mubr.f32.gmra.mrb[0].mxu0 %v1205
    %v1394 = vpop.f32.mrb[0].mxu0
    %v1395 = vadd.f32 0.0, %v1394
    %v1396 = vpop.f32.mrb[0].mxu0
    %1397 = vmatprep.mubr.f32.mxu0 0.0
    %1398 = vmatmul.mubr.f32.gmra.mrb[0].mxu0 %v1208
    %v1399 = vpop.f32.mrb[0].mxu0
    %v1400 = vadd.f32 0.0, %v1399
    %v1401 = vpop.f32.mrb[0].mxu0
    %1402 = vmatprep.mubr.f32.mxu0 0.0
    %1403 = vmatmul.mubr.f32.gmra.mrb[0].mxu0 %v1211
    %v1404 = vpop.f32.mrb[0].mxu0
    %v1405 = vadd.f32 0.0, %v1404
    %v1406 = vpop.f32.mrb[0].mxu0
    %1407 = vmatprep.mubr.f32.mxu0 0.0
    %1408 = vmatmul.mubr.f32.gmra.mrb[0].mxu0 %v1214
    %v1409 = vpop.f32.mrb[0].mxu0
    %v1410 = vadd.f32 0.0, %v1409
    %v1411 = vpop.f32.mrb[0].mxu0
    %1412 = vmatprep.mubr.f32.mxu0 0.0
    %1413 = vmatmul.mubr.f32.gmra.mrb[0].mxu0 %v1217
    %v1414 = vpop.f32.mrb[0].mxu0
    %v1415 = vadd.f32 0.0, %v1414
    %v1416 = vpop.f32.mrb[0].mxu0
    %1417 = vmatprep.mubr.f32.mxu0 0.0
    %1418 = vmatmul.mubr.f32.gmra.mrb[0].mxu0 %v1220
    %v1419 = vpop.f32.mrb[0].mxu0
    %v1420 = vadd.f32 0.0, %v1419
    %v1421 = vpop.f32.mrb[0].mxu0
    %1422 = vmatprep.mubr.f32.mxu0 0.0
    %1423 = vmatmul.mubr.f32.gmra.mrb[0].mxu0 %v1223
    %v1424 = vpop.f32.mrb[0].mxu0
    %v1425 = vadd.f32 0.0, %v1424
    %v1426 = vpop.f32.mrb[0].mxu0
    %1427 = vmatprep.mubr.f32.mxu0 0.0
    %1428 = vmatmul.mubr.f32.gmra.mrb[0].mxu0 %v1226
    %v1429 = vpop.f32.mrb[0].mxu0
    %v1430 = vadd.f32 0.0, %v1429
    %v1431 = vpop.f32.mrb[0].mxu0
    %1432 = vmatprep.mubr.f32.mxu0 0.0
    %1433 = vmatmul.mubr.f32.gmra.mrb[0].mxu0 %v1229
    %v1434 = vpop.f32.mrb[0].mxu0
    %v1435 = vadd.f32 0.0, %v1434
    %v1436 = vpop.f32.mrb[0].mxu0
    %1437 = vmatprep.mubr.f32.mxu0 0.0
    %1438 = vmatmul.mubr.f32.gmra.mrb[0].mxu0 %v1232
    %v1439 = vpop.f32.mrb[0].mxu0
    %v1440 = vadd.f32 0.0, %v1439
    %v1441 = vpop.f32.mrb[0].mxu0
    %1442 = vmatprep.mubr.f32.mxu0 0.0
    %1443 = vmatmul.mubr.f32.gmra.mrb[0].mxu0 %v1235
    %v1444 = vpop.f32.mrb[0].mxu0
    %v1445 = vadd.f32 0.0, %v1444
    %v1446 = vpop.f32.mrb[0].mxu0
    %1447 = vmatprep.mubr.f32.mxu0 0.0
    %1448 = vmatmul.mubr.f32.gmra.mrb[0].mxu0 %v1238
    %v1449 = vpop.f32.mrb[0].mxu0
    %v1450 = vadd.f32 0.0, %v1449
    %v1451 = vpop.f32.mrb[0].mxu0
    %1452 = vmatprep.mubr.f32.mxu0 0.0
    %1453 = vmatmul.mubr.f32.gmra.mrb[0].mxu0 %v1241
    %v1454 = vpop.f32.mrb[0].mxu0
    %v1455 = vadd.f32 0.0, %v1454
    %v1456 = vpop.f32.mrb[0].mxu0
    %1457 = vmatprep.mubr.f32.mxu0 0.0
    %1458 = vmatmul.mubr.f32.gmra.mrb[0].mxu0 %v1244
    %v1459 = vpop.f32.mrb[0].mxu0
    %v1460 = vadd.f32 0.0, %v1459
    %v1461 = vpop.f32.mrb[0].mxu0
    %1462 = vmatprep.mubr.f32.mxu0 0.0
    %1463 = vmatmul.mubr.f32.gmra.mrb[0].mxu0 %v1247
    %v1464 = vpop.f32.mrb[0].mxu0
    %v1465 = vadd.f32 0.0, %v1464
    %v1466 = vpop.f32.mrb[0].mxu0
    %1467 = vmatprep.mubr.f32.mxu0 0.0
    %1468 = vmatmul.mubr.f32.gmra.mrb[0].mxu0 %v1250
    %v1469 = vpop.f32.mrb[0].mxu0
    %v1470 = vadd.f32 0.0, %v1469
    %v1471 = vpop.f32.mrb[0].mxu0
    %1472 = vmatprep.mubr.f32.mxu0 0.0
    %1473 = vmatmul.mubr.f32.gmra.mrb[0].mxu0 %v1253
    %v1474 = vpop.f32.mrb[0].mxu0
    %v1475 = vadd.f32 0.0, %v1474
    %v1476 = vpop.f32.mrb[0].mxu0
    %1477 = vmatprep.mubr.f32.mxu0 0.0
    %1478 = vmatmul.mubr.f32.gmra.mrb[0].mxu0 %v1256
    %v1479 = vpop.f32.mrb[0].mxu0
    %v1480 = vadd.f32 0.0, %v1479
    %v1481 = vpop.f32.mrb[0].mxu0
    %1482 = vmatprep.mubr.f32.mxu0 0.0
    %1483 = vmatmul.mubr.f32.gmra.mrb[0].mxu0 %v1259
    %v1484 = vpop.f32.mrb[0].mxu0
    %v1485 = vadd.f32 0.0, %v1484
    %v1486 = vpop.f32.mrb[0].mxu0
    %1487 = vmatprep.mubr.f32.mxu0 0.0
    %1488 = vmatmul.mubr.f32.gmra.mrb[0].mxu0 %v1262
    %v1489 = vpop.f32.mrb[0].mxu0
    %v1490 = vadd.f32 0.0, %v1489
    %v1491 = vpop.f32.mrb[0].mxu0
    %1492 = vmatprep.mubr.f32.mxu0 0.0
    %1493 = vmatmul.mubr.f32.gmra.mrb[0].mxu0 %v1265
    %v1494 = vpop.f32.mrb[0].mxu0
    %v1495 = vadd.f32 0.0, %v1494
    %v1496 = vpop.f32.mrb[0].mxu0
    %1497 = vmatprep.mubr.f32.mxu0 0.0
    %1498 = vmatmul.mubr.f32.gmra.mrb[0].mxu0 %v1268
    %v1499 = vpop.f32.mrb[0].mxu0
    %v1500 = vadd.f32 0.0, %v1499
    %v1501 = vpop.f32.mrb[0].mxu0
    %1502 = vmatprep.mubr.f32.mxu0 0.0
    %1503 = vmatmul.mubr.f32.gmra.mrb[0].mxu0 %v1271
    %v1504 = vpop.f32.mrb[0].mxu0
    %v1505 = vadd.f32 0.0, %v1504
    %v1506 = vpop.f32.mrb[0].mxu0
    %1507 = vmatprep.mubr.f32.mxu0 0.0
    %1508 = vmatmul.mubr.f32.gmra.mrb[0].mxu0 %v1274
    %v1509 = vpop.f32.mrb[0].mxu0
    %v1510 = vadd.f32 0.0, %v1509
    %v1511 = vpop.f32.mrb[0].mxu0
    %1512 = vmatprep.mubr.f32.mxu0 0.0
    %1513 = vmatmul.mubr.f32.gmra.mrb[0].mxu0 %v1277
    %v1514 = vpop.f32.mrb[0].mxu0
    %v1515 = vadd.f32 0.0, %v1514
    %v1516 = vpop.f32.mrb[0].mxu0
    %1517 = vmatprep.mubr.f32.mxu0 0.0
    %1518 = vmatmul.mubr.f32.gmra.mrb[0].mxu0 %v1280
    %v1519 = vpop.f32.mrb[0].mxu0
    %v1520 = vadd.f32 0.0, %v1519
    %v1521 = vpop.f32.mrb[0].mxu0
    %1522 = vmatprep.mubr.f32.mxu0 0.0
    %1523 = vmatmul.mubr.f32.gmra.mrb[0].mxu0 %v1283
    %v1524 = vpop.f32.mrb[0].mxu0
    %v1525 = vadd.f32 0.0, %v1524
    %v1526 = vpop.f32.mrb[0].mxu0
    %1527 = vmatprep.mubr.f32.mxu0 0.0
    %1528 = vmatmul.mubr.f32.gmra.mrb[0].mxu0 %v1286
    %v1529 = vpop.f32.mrb[0].mxu0
    %v1530 = vadd.f32 0.0, %v1529
    %v1531 = vpop.f32.mrb[0].mxu0
    %1532 = vmatprep.mubr.f32.mxu0 0.0
    %1533 = vmatmul.mubr.f32.gmra.mrb[0].mxu0 %v1289
    %v1534 = vpop.f32.mrb[0].mxu0
    %v1535 = vadd.f32 0.0, %v1534
    %v1536 = vpop.f32.mrb[0].mxu0
    %1537 = vmatprep.mubr.f32.mxu0 0.0
    %1538 = vmatmul.mubr.f32.gmra.mrb[0].mxu0 %v1292
    %v1539 = vpop.f32.mrb[0].mxu0
    %v1540 = vadd.f32 0.0, %v1539
    %v1541 = vpop.f32.mrb[0].mxu0
    %1542 = vmatprep.mubr.f32.mxu0 0.0
    %1543 = vmatmul.mubr.f32.gmra.mrb[0].mxu0 %v1295
    %v1544 = vpop.f32.mrb[0].mxu0
    %v1545 = vadd.f32 0.0, %v1544
    %v1546 = vpop.f32.mrb[0].mxu0
    %1547 = vmatprep.mubr.f32.mxu0 0.0
    %1548 = vmatmul.mubr.f32.gmra.mrb[0].mxu0 %v1298
    %v1549 = vpop.f32.mrb[0].mxu0
    %v1550 = vadd.f32 0.0, %v1549
    %v1551 = vpop.f32.mrb[0].mxu0
    %1552 = vmatprep.mubr.f32.mxu0 0.0
    %1553 = vmatmul.mubr.f32.gmra.mrb[0].mxu0 %v1301
    %v1554 = vpop.f32.mrb[0].mxu0
    %v1555 = vadd.f32 0.0, %v1554
    %v1556 = vpop.f32.mrb[0].mxu0
    %1557 = vdwg.mxu0
    %v1558 = vsub.f32 %v959, %v1370
    %v1559 = vsub.f32 %v960, %v1375
    %v1560 = vsub.f32 %v961, %v1380
    %v1561 = vsub.f32 %v962, %v1385
    %v1562 = vsub.f32 %v963, %v1390
    %v1563 = vsub.f32 %v964, %v1395
    %v1564 = vsub.f32 %v965, %v1400
    %v1565 = vsub.f32 %v966, %v1405
    %v1566 = vsub.f32 %v967, %v1410
    %v1567 = vsub.f32 %v968, %v1415
    %v1568 = vsub.f32 %v969, %v1420
    %v1569 = vsub.f32 %v970, %v1425
    %v1570 = vsub.f32 %v971, %v1430
    %v1571 = vsub.f32 %v972, %v1435
    %v1572 = vsub.f32 %v973, %v1440
    %v1573 = vsub.f32 %v974, %v1445
    %v1574 = vsub.f32 %v975, %v1450
    %v1575 = vsub.f32 %v976, %v1455
    %v1576 = vsub.f32 %v977, %v1460
    %v1577 = vsub.f32 %v978, %v1465
    %v1578 = vsub.f32 %v979, %v1470
    %v1579 = vsub.f32 %v980, %v1475
    %v1580 = vsub.f32 %v981, %v1480
    %v1581 = vsub.f32 %v982, %v1485
    %v1582 = vsub.f32 %v983, %v1490
    %v1583 = vsub.f32 %v984, %v1495
    %v1584 = vsub.f32 %v985, %v1500
    %v1585 = vsub.f32 %v986, %v1505
    %v1586 = vsub.f32 %v987, %v1510
    %v1587 = vsub.f32 %v988, %v1515
    %v1588 = vsub.f32 %v989, %v1520
    %v1589 = vsub.f32 %v990, %v1525
    %v1590 = vsub.f32 %v991, %v1530
    %v1591 = vsub.f32 %v992, %v1535
    %v1592 = vsub.f32 %v993, %v1540
    %v1593 = vsub.f32 %v994, %v1545
    %v1594 = vsub.f32 %v995, %v1550
    %v1595 = vsub.f32 %v996, %v1555
    %v1596 = vsel %vm246, %v1558, 0.0
    %v1597 = vsel %vm247, %v1559, 0.0
    %v1598 = vsel %vm248, %v1560, 0.0
    %v1599 = vsel %vm249, %v1561, 0.0
    %v1600 = vsel %vm250, %v1562, 0.0
    %v1601 = vsel %vm251, %v1563, 0.0
    %v1602 = vsel %vm252, %v1564, 0.0
    %v1603 = vsel %vm253, %v1565, 0.0
    %v1604 = vsel %vm254, %v1566, 0.0
    %v1605 = vsel %vm255, %v1567, 0.0
    %v1606 = vsel %vm256, %v1568, 0.0
    %v1607 = vsel %vm257, %v1569, 0.0
    %v1608 = vsel %vm258, %v1570, 0.0
    %v1609 = vsel %vm259, %v1571, 0.0
    %v1610 = vsel %vm260, %v1572, 0.0
    %v1611 = vsel %vm261, %v1573, 0.0
    %v1612 = vsel %vm262, %v1574, 0.0
    %v1613 = vsel %vm263, %v1575, 0.0
    %v1614 = vsel %vm264, %v1576, 0.0
    %v1615 = vsel %vm265, %v1577, 0.0
    %v1616 = vsel %vm266, %v1578, 0.0
    %v1617 = vsel %vm267, %v1579, 0.0
    %v1618 = vsel %vm268, %v1580, 0.0
    %v1619 = vsel %vm269, %v1581, 0.0
    %v1620 = vsel %vm270, %v1582, 0.0
    %v1621 = vsel %vm271, %v1583, 0.0
    %v1622 = vsel %vm272, %v1584, 0.0
    %v1623 = vsel %vm273, %v1585, 0.0
    %v1624 = vsel %vm274, %v1586, 0.0
    %v1625 = vsel %vm275, %v1587, 0.0
    %v1626 = vsel %vm276, %v1588, 0.0
    %v1627 = vsel %vm277, %v1589, 0.0
    %v1628 = vsel %vm278, %v1590, 0.0
    %v1629 = vsel %vm279, %v1591, 0.0
    %v1630 = vsel %vm280, %v1592, 0.0
    %v1631 = vsel %vm281, %v1593, 0.0
    %v1632 = vsel %vm282, %v1594, 0.0
    %v1633 = vsel %vm283, %v1595, 0.0
    %vm1634 = vcmask 7168
    %v1635 = vsel %vm1634, %v1596, 0.0
    %v1636 = vsel %vm1634, %v1597, 0.0
    %v1637 = vadd.f32 %v1635, %v1636
    %v1638 = vsel %vm1634, %v1598, 0.0
    %v1639 = vadd.f32 %v1637, %v1638
    %v1640 = vsel %vm1634, %v1599, 0.0
    %v1641 = vadd.f32 %v1639, %v1640
    %v1642 = vsel %vm1634, %v1600, 0.0
    %v1643 = vadd.f32 %v1641, %v1642
    %v1644 = vsel %vm1634, %v1601, 0.0
    %v1645 = vadd.f32 %v1643, %v1644
    %v1646 = vsel %vm1634, %v1602, 0.0
    %v1647 = vadd.f32 %v1645, %v1646
    %v1648 = vsel %vm1634, %v1603, 0.0
    %v1649 = vadd.f32 %v1647, %v1648
    %v1650 = vsel %vm1634, %v1604, 0.0
    %v1651 = vadd.f32 %v1649, %v1650
    %v1652 = vsel %vm1634, %v1605, 0.0
    %v1653 = vadd.f32 %v1651, %v1652
    %v1654 = vsel %vm1634, %v1606, 0.0
    %v1655 = vadd.f32 %v1653, %v1654
    %v1656 = vsel %vm1634, %v1607, 0.0
    %v1657 = vadd.f32 %v1655, %v1656
    %v1658 = vsel %vm1634, %v1608, 0.0
    %v1659 = vadd.f32 %v1657, %v1658
    %v1660 = vsel %vm1634, %v1609, 0.0
    %v1661 = vadd.f32 %v1659, %v1660
    %v1662 = vsel %vm1634, %v1610, 0.0
    %v1663 = vadd.f32 %v1661, %v1662
    %v1664 = vsel %vm1634, %v1611, 0.0
    %v1665 = vadd.f32 %v1663, %v1664
    %v1666 = vsel %vm1634, %v1612, 0.0
    %v1667 = vadd.f32 %v1665, %v1666
    %v1668 = vsel %vm1634, %v1613, 0.0
    %v1669 = vadd.f32 %v1667, %v1668
    %v1670 = vsel %vm1634, %v1614, 0.0
    %v1671 = vadd.f32 %v1669, %v1670
    %v1672 = vsel %vm1634, %v1615, 0.0
    %v1673 = vadd.f32 %v1671, %v1672
    %v1674 = vsel %vm1634, %v1616, 0.0
    %v1675 = vadd.f32 %v1673, %v1674
    %v1676 = vsel %vm1634, %v1617, 0.0
    %v1677 = vadd.f32 %v1675, %v1676
    %v1678 = vsel %vm1634, %v1618, 0.0
    %v1679 = vadd.f32 %v1677, %v1678
    %v1680 = vsel %vm1634, %v1619, 0.0
    %v1681 = vadd.f32 %v1679, %v1680
    %v1682 = vsel %vm1634, %v1620, 0.0
    %v1683 = vadd.f32 %v1681, %v1682
    %v1684 = vsel %vm1634, %v1621, 0.0
    %v1685 = vadd.f32 %v1683, %v1684
    %v1686 = vsel %vm1634, %v1622, 0.0
    %v1687 = vadd.f32 %v1685, %v1686
    %v1688 = vsel %vm1634, %v1623, 0.0
    %v1689 = vadd.f32 %v1687, %v1688
    %v1690 = vsel %vm1634, %v1624, 0.0
    %v1691 = vadd.f32 %v1689, %v1690
    %v1692 = vsel %vm1634, %v1625, 0.0
    %v1693 = vadd.f32 %v1691, %v1692
    %v1694 = vsel %vm1634, %v1626, 0.0
    %v1695 = vadd.f32 %v1693, %v1694
    %v1696 = vsel %vm1634, %v1627, 0.0
    %v1697 = vadd.f32 %v1695, %v1696
    %v1698 = vsel %vm1634, %v1628, 0.0
    %v1699 = vadd.f32 %v1697, %v1698
    %v1700 = vsel %vm1634, %v1629, 0.0
    %v1701 = vadd.f32 %v1699, %v1700
    %v1702 = vsel %vm1634, %v1630, 0.0
    %v1703 = vadd.f32 %v1701, %v1702
    %v1704 = vsel %vm1634, %v1631, 0.0
    %v1705 = vadd.f32 %v1703, %v1704
    %v1706 = vsel %vm1634, %v1632, 0.0
    %v1707 = vadd.f32 %v1705, %v1706
    %vm1708 = vcmask 3072
    %v1709 = vsel %vm1708, %v1633, 0.0
    %v1710 = vadd.f32 %v1707, %v1709
    %1711 = vadd.xlane.f32.xlu0 %v1710
    %v1712 = vpop.xlane.xlu0 %1711
    %v1713 = vrot.slane %v1712, 4
    %v1714 = vadd.f32 %v1712, %v1713
    %v1715 = vrot.slane %v1714, 2
    %v1716 = vadd.f32 %v1714, %v1715
    %v1717 = vrot.slane %v1716, 1
    %v1718 = vadd.f32 %v1716, %v1717
    %s1719 = vtos %v1718
    %s1720 = scalar_lea.smem [#allocation2], 0
    %1721 = sst [smem:[%s1720]] %s1719
    %v1722 = vsel %vm246, 1, 0
    %v1723 = vsel %vm247, 1, 0
    %v1724 = vsel %vm248, 1, 0
    %v1725 = vsel %vm249, 1, 0
    %v1726 = vsel %vm250, 1, 0
    %v1727 = vsel %vm251, 1, 0
    %v1728 = vsel %vm252, 1, 0
    %v1729 = vsel %vm253, 1, 0
    %v1730 = vsel %vm254, 1, 0
    %v1731 = vsel %vm255, 1, 0
    %v1732 = vsel %vm256, 1, 0
    %v1733 = vsel %vm257, 1, 0
    %v1734 = vsel %vm258, 1, 0
    %v1735 = vsel %vm259, 1, 0
    %v1736 = vsel %vm260, 1, 0
    %v1737 = vsel %vm261, 1, 0
    %v1738 = vsel %vm262, 1, 0
    %v1739 = vsel %vm263, 1, 0
    %v1740 = vsel %vm264, 1, 0
    %v1741 = vsel %vm265, 1, 0
    %v1742 = vsel %vm266, 1, 0
    %v1743 = vsel %vm267, 1, 0
    %v1744 = vsel %vm268, 1, 0
    %v1745 = vsel %vm269, 1, 0
    %v1746 = vsel %vm270, 1, 0
    %v1747 = vsel %vm271, 1, 0
    %v1748 = vsel %vm272, 1, 0
    %v1749 = vsel %vm273, 1, 0
    %v1750 = vsel %vm274, 1, 0
    %v1751 = vsel %vm275, 1, 0
    %v1752 = vsel %vm276, 1, 0
    %v1753 = vsel %vm277, 1, 0
    %v1754 = vsel %vm278, 1, 0
    %v1755 = vsel %vm279, 1, 0
    %v1756 = vsel %vm280, 1, 0
    %v1757 = vsel %vm281, 1, 0
    %v1758 = vsel %vm282, 1, 0
    %v1759 = vsel %vm283, 1, 0
    %v1760 = vcvt.s32.f32 %v1722
    %v1761 = vcvt.s32.f32 %v1723
    %v1762 = vcvt.s32.f32 %v1724
    %v1763 = vcvt.s32.f32 %v1725
    %v1764 = vcvt.s32.f32 %v1726
    %v1765 = vcvt.s32.f32 %v1727
    %v1766 = vcvt.s32.f32 %v1728
    %v1767 = vcvt.s32.f32 %v1729
    %v1768 = vcvt.s32.f32 %v1730
    %v1769 = vcvt.s32.f32 %v1731
    %v1770 = vcvt.s32.f32 %v1732
    %v1771 = vcvt.s32.f32 %v1733
    %v1772 = vcvt.s32.f32 %v1734
    %v1773 = vcvt.s32.f32 %v1735
    %v1774 = vcvt.s32.f32 %v1736
    %v1775 = vcvt.s32.f32 %v1737
    %v1776 = vcvt.s32.f32 %v1738
    %v1777 = vcvt.s32.f32 %v1739
    %v1778 = vcvt.s32.f32 %v1740
    %v1779 = vcvt.s32.f32 %v1741
    %v1780 = vcvt.s32.f32 %v1742
    %v1781 = vcvt.s32.f32 %v1743
    %v1782 = vcvt.s32.f32 %v1744
    %v1783 = vcvt.s32.f32 %v1745
    %v1784 = vcvt.s32.f32 %v1746
    %v1785 = vcvt.s32.f32 %v1747
    %v1786 = vcvt.s32.f32 %v1748
    %v1787 = vcvt.s32.f32 %v1749
    %v1788 = vcvt.s32.f32 %v1750
    %v1789 = vcvt.s32.f32 %v1751
    %v1790 = vcvt.s32.f32 %v1752
    %v1791 = vcvt.s32.f32 %v1753
    %v1792 = vcvt.s32.f32 %v1754
    %v1793 = vcvt.s32.f32 %v1755
    %v1794 = vcvt.s32.f32 %v1756
    %v1795 = vcvt.s32.f32 %v1757
    %v1796 = vcvt.s32.f32 %v1758
    %v1797 = vcvt.s32.f32 %v1759
    %v1798 = vsel %vm1634, %v1760, 0.0
    %v1799 = vsel %vm1634, %v1761, 0.0
    %v1800 = vadd.f32 %v1798, %v1799
    %v1801 = vsel %vm1634, %v1762, 0.0
    %v1802 = vadd.f32 %v1800, %v1801
    %v1803 = vsel %vm1634, %v1763, 0.0
    %v1804 = vadd.f32 %v1802, %v1803
    %v1805 = vsel %vm1634, %v1764, 0.0
    %v1806 = vadd.f32 %v1804, %v1805
    %v1807 = vsel %vm1634, %v1765, 0.0
    %v1808 = vadd.f32 %v1806, %v1807
    %v1809 = vsel %vm1634, %v1766, 0.0
    %v1810 = vadd.f32 %v1808, %v1809
    %v1811 = vsel %vm1634, %v1767, 0.0
    %v1812 = vadd.f32 %v1810, %v1811
    %v1813 = vsel %vm1634, %v1768, 0.0
    %v1814 = vadd.f32 %v1812, %v1813
    %v1815 = vsel %vm1634, %v1769, 0.0
    %v1816 = vadd.f32 %v1814, %v1815
    %v1817 = vsel %vm1634, %v1770, 0.0
    %v1818 = vadd.f32 %v1816, %v1817
    %v1819 = vsel %vm1634, %v1771, 0.0
    %v1820 = vadd.f32 %v1818, %v1819
    %v1821 = vsel %vm1634, %v1772, 0.0
    %v1822 = vadd.f32 %v1820, %v1821
    %v1823 = vsel %vm1634, %v1773, 0.0
    %v1824 = vadd.f32 %v1822, %v1823
    %v1825 = vsel %vm1634, %v1774, 0.0
    %v1826 = vadd.f32 %v1824, %v1825
    %v1827 = vsel %vm1634, %v1775, 0.0
    %v1828 = vadd.f32 %v1826, %v1827
    %v1829 = vsel %vm1634, %v1776, 0.0
    %v1830 = vadd.f32 %v1828, %v1829
    %v1831 = vsel %vm1634, %v1777, 0.0
    %v1832 = vadd.f32 %v1830, %v1831
    %v1833 = vsel %vm1634, %v1778, 0.0
    %v1834 = vadd.f32 %v1832, %v1833
    %v1835 = vsel %vm1634, %v1779, 0.0
    %v1836 = vadd.f32 %v1834, %v1835
    %v1837 = vsel %vm1634, %v1780, 0.0
    %v1838 = vadd.f32 %v1836, %v1837
    %v1839 = vsel %vm1634, %v1781, 0.0
    %v1840 = vadd.f32 %v1838, %v1839
    %v1841 = vsel %vm1634, %v1782, 0.0
    %v1842 = vadd.f32 %v1840, %v1841
    %v1843 = vsel %vm1634, %v1783, 0.0
    %v1844 = vadd.f32 %v1842, %v1843
    %v1845 = vsel %vm1634, %v1784, 0.0
    %v1846 = vadd.f32 %v1844, %v1845
    %v1847 = vsel %vm1634, %v1785, 0.0
    %v1848 = vadd.f32 %v1846, %v1847
    %v1849 = vsel %vm1634, %v1786, 0.0
    %v1850 = vadd.f32 %v1848, %v1849
    %v1851 = vsel %vm1634, %v1787, 0.0
    %v1852 = vadd.f32 %v1850, %v1851
    %v1853 = vsel %vm1634, %v1788, 0.0
    %v1854 = vadd.f32 %v1852, %v1853
    %v1855 = vsel %vm1634, %v1789, 0.0
    %v1856 = vadd.f32 %v1854, %v1855
    %v1857 = vsel %vm1634, %v1790, 0.0
    %v1858 = vadd.f32 %v1856, %v1857
    %v1859 = vsel %vm1634, %v1791, 0.0
    %v1860 = vadd.f32 %v1858, %v1859
    %v1861 = vsel %vm1634, %v1792, 0.0
    %v1862 = vadd.f32 %v1860, %v1861
    %v1863 = vsel %vm1634, %v1793, 0.0
    %v1864 = vadd.f32 %v1862, %v1863
    %v1865 = vsel %vm1634, %v1794, 0.0
    %v1866 = vadd.f32 %v1864, %v1865
    %v1867 = vsel %vm1634, %v1795, 0.0
    %v1868 = vadd.f32 %v1866, %v1867
    %v1869 = vsel %vm1634, %v1796, 0.0
    %v1870 = vadd.f32 %v1868, %v1869
    %v1871 = vsel %vm1708, %v1797, 0.0
    %v1872 = vadd.f32 %v1870, %v1871
    %1873 = vadd.xlane.f32.xlu0 %v1872
    %v1874 = vpop.xlane.xlu0 %1873
    %v1875 = vrot.slane %v1874, 4
    %v1876 = vadd.f32 %v1874, %v1875
    %v1877 = vrot.slane %v1876, 2
    %v1878 = vadd.f32 %v1876, %v1877
    %v1879 = vrot.slane %v1878, 1
    %v1880 = vadd.f32 %v1878, %v1879
    %s1881 = vtos %v1880
    %s1882 = scalar_lea.smem [#allocation4], 0
    %1883 = sst [smem:[%s1882]] %s1881
    // Predicated region
    $region10: #{ppc_loss.1} parent=1 // pred_check
      _
    $region11: #{ppc_loss.1} parent=1 // pred_check_branch
      %1885 = sbr.rel (0) target = $region13
    $region12: #{ppc_loss.1} parent=1 // pred_region
      %s1887 = ssub.s32 16, 16
      %1888 = vsyncadd [#allocation3], %s1887
      %1891 = dma.smem_to_hbm [#allocation2], 16, %s2, [#allocation3]
    $region13: #{ppc_loss.1} parent=1 // pred_fallthru
      _
    // Predicated region
    $region14: #{ppc_loss.1} parent=1 // pred_check
      _
    $region15: #{ppc_loss.1} parent=1 // pred_check_branch
      %1893 = sbr.rel (0) target = $region17
    $region16: #{ppc_loss.1} parent=1 // pred_region
      %s1895 = ssub.s32 16, 16
      %1896 = vsyncadd [#allocation5], %s1895
      %1899 = dma.smem_to_hbm [#allocation4], 16, %s3, [#allocation5]
    $region17: #{ppc_loss.1} parent=1 // pred_fallthru
      _
    // Predicated region
    $region18: #{ppc_loss.1} parent=1 // pred_check
      _
    $region19: #{ppc_loss.1} parent=1 // pred_check_branch
      %1901 = sbr.rel (0) target = $region21
    $region20: #{ppc_loss.1} parent=1 // pred_region
      %1902 = dma.done [#allocation3], 16
    $region21: #{ppc_loss.1} parent=1 // pred_fallthru
      _
    // Predicated region
    $region22: #{ppc_loss.1} parent=1 // pred_check
      _
    $region23: #{ppc_loss.1} parent=1 // pred_check_branch
      %1904 = sbr.rel (0) target = $region25
    $region24: #{ppc_loss.1} parent=1 // pred_region
      %1905 = dma.done [#allocation5], 16
    $region25: #{ppc_loss.1} parent=1 // pred_fallthru
      _
    %1906 = sfence
    %1907 = vsyncpa [#allocation3], 1
    %1908 = vsyncpa [#allocation5], 1

</llo_original>
